<compile_context>
chip_gen: v5e
topology: v5e:2x2
jax: 0.10.0
libtpu: 0.0.40
codegen_flags: <defaults>
</compile_context>

<pallas_src>
import functools

import jax
import jax.numpy as jnp
from jax import lax
from jax.experimental import pallas as pl
from jax.experimental.pallas import tpu as pltpu

# ----------------------------- config --------------------------------------
VOCAB = 512
HIDDEN = 128
NUM_LAYERS = 2
NUM_HEADS = 4
HEAD_DIM = HIDDEN // NUM_HEADS
INTERMEDIATE = 256
MAX_POS = 64
TYPE_VOCAB = 2
LN_EPS = 1e-12

# Row layout of the packed per-layer "small params" slab, shape (8, 3*HIDDEN).
(_ROW_BQKV, _ROW_B1, _ROW_BO, _ROW_LN1G,
 _ROW_LN1B, _ROW_B2, _ROW_LN2G, _ROW_LN2B) = range(8)


# --------------------------- in-kernel helpers ------------------------------
def _layer_norm(x, gamma, beta, eps=LN_EPS):
    mean = jnp.mean(x, axis=-1, keepdims=True)
    cen = x - mean
    var = jnp.mean(cen * cen, axis=-1, keepdims=True)
    return cen * lax.rsqrt(var + eps) * gamma + beta


def _gelu_erf(x):
    # HF "gelu": exact erf-based GELU (numeric parity with the reference).
    return 0.5 * x * (1.0 + lax.erf(x * 0.7071067811865475))


# ----------------------------- fused kernel ---------------------------------
def _encoder_stack_kernel(x_ref, mask_ref, embln_ref,
                          wqkv_ref, wo_ref, w1_ref, w2_ref, small_ref,
                          out_ref, *, batch, seq):
    """One grid step == one encoder layer; activations stay resident in VMEM."""
    layer = pl.program_id(0)
    H, I, nh, dh = HIDDEN, INTERMEDIATE, NUM_HEADS, HEAD_DIM
    M = batch * seq
    scale = 1.0 / float(dh) ** 0.5

    # First grid step: embedding LayerNorm into the resident output block.
    @pl.when(layer == 0)
    def _():
        out_ref[...] = _layer_norm(x_ref[...],
                                   embln_ref[0:1, :], embln_ref[1:2, :])

    x = out_ref[...]                                              # (M, H) f32
    small = small_ref[...]                                        # (8, 3H) f32

    def mm(a, w_ref):
        # bf16 x bf16 -> f32 MXU matmul.
        return jnp.dot(a.astype(jnp.bfloat16), w_ref[...],
                       preferred_element_type=jnp.float32)

    # ---- fused QKV projection: one lane-dense (M, 3H) matmul ----
    qkv = mm(x, wqkv_ref) + small[_ROW_BQKV:_ROW_BQKV + 1, :]

    # ---- packed block-diagonal attention ----
    # Pack head-major onto rows: row (h*M + b*S + s) holds head h of token (b,s).
    q_pack = jnp.concatenate(
        [qkv[:, h * dh:(h + 1) * dh] for h in range(nh)], axis=0)          # (P, dh)
    k_pack = jnp.concatenate(
        [qkv[:, H + h * dh:H + (h + 1) * dh] for h in range(nh)], axis=0)  # (P, dh)
    v_pack = jnp.concatenate(
        [qkv[:, 2 * H + h * dh:2 * H + (h + 1) * dh] for h in range(nh)],
        axis=0)                                                             # (P, dh)

    # ONE full-width score matmul; invalid cross-(head,batch) pairs are killed
    # by the precomputed -1e9 entries of the fused mask.
    s = lax.dot_general(q_pack.astype(jnp.bfloat16), k_pack.astype(jnp.bfloat16),
                        (((1,), (1,)), ((), ())),
                        preferred_element_type=jnp.float32)                # (P, P)
    s = s * scale + mask_ref[...]
    s = s - jnp.max(s, axis=-1, keepdims=True)
    p = jnp.exp(s)
    p = p * pl.reciprocal(jnp.sum(p, axis=-1, keepdims=True), approx=True)

    ctx_pack = jnp.dot(p.astype(jnp.bfloat16), v_pack.astype(jnp.bfloat16),
                       preferred_element_type=jnp.float32)                 # (P, dh)

    # Relayout (nh*M, dh) -> lane-dense (M, H) in registers (no VMEM scratch).
    ctx = jnp.concatenate(
        [ctx_pack[h * M:(h + 1) * M, :] for h in range(nh)], axis=1)       # (M, H)

    # ---- output projection + residual + LayerNorm ----
    attn = mm(ctx, wo_ref) + small[_ROW_BO:_ROW_BO + 1, :H]
    x1 = _layer_norm(attn + x,
                     small[_ROW_LN1G:_ROW_LN1G + 1, :H],
                     small[_ROW_LN1B:_ROW_LN1B + 1, :H])

    # ---- FFN (exact erf-GELU) + residual + LayerNorm ----
    inter = _gelu_erf(mm(x1, w1_ref) + small[_ROW_B1:_ROW_B1 + 1, :I])
    ffn = mm(inter, w2_ref) + small[_ROW_B2:_ROW_B2 + 1, :H]
    out_ref[...] = _layer_norm(ffn + x1,
                               small[_ROW_LN2G:_ROW_LN2G + 1, :H],
                               small[_ROW_LN2B:_ROW_LN2B + 1, :H])


def encoder_stack(x, fused_mask, emb_ln, stacked, batch, seq):
    """x: (B*S, H) pre-LN embeddings; fused_mask: (nh*B*S, nh*B*S) additive."""
    H, H3, I = HIDDEN, 3 * HIDDEN, INTERMEDIATE
    M = batch * seq
    P = NUM_HEADS * M
    kernel = functools.partial(_encoder_stack_kernel, batch=batch, seq=seq)

    def fixed(shape):
        # Same block every grid step -> fetched once (no re-DMA).
        return pl.BlockSpec(shape, lambda l, _n=len(shape): (0,) * _n)

    def per_layer(shape):
        # Leading layer axis selected by the grid index and squeezed away.
        return pl.BlockSpec((None,) + shape,
                            lambda l, _n=len(shape): (l,) + (0,) * _n)

    return pl.pallas_call(
        kernel,
        out_shape=jax.ShapeDtypeStruct((M, H), jnp.float32),
        grid=(NUM_LAYERS,),
        in_specs=[
            fixed((M, H)),        # pre-LN embeddings
            fixed((P, P)),        # fused block-diag + padding attention mask
            fixed((2, H)),        # embedding LN gamma / beta
            per_layer((H, H3)),   # wqkv  (bf16)
            per_layer((H, H)),    # wo    (bf16)
            per_layer((H, I)),    # w1    (bf16)
            per_layer((I, H)),    # w2    (bf16)
            per_layer((8, H3)),   # packed biases + LN params (f32)
        ],
        out_specs=fixed((M, H)),
        compiler_params=pltpu.CompilerParams(
            dimension_semantics=("arbitrary",)),
    )(x, fused_mask, emb_ln,
      stacked["wqkv"], stacked["wo"], stacked["w1"], stacked["w2"],
      stacked["small"])


# --------------------------- model forward ----------------------------------
def bert_for_reranking_forward(params, input_ids, attention_mask):
    B, S = input_ids.shape
    H = HIDDEN
    M = B * S
    P = NUM_HEADS * M

    # Embeddings: word + position + token_type (all-zero ids -> row 0).
    word = jnp.take(params["word_emb"], input_ids, axis=0)          # (B, S, H)
    pos = params["pos_emb"][:S][None, :, :]                         # (1, S, H)
    tok = params["tok_emb"][0]                                      # (H,)
    x = (word + pos + tok).reshape(M, H)                            # pre-LN

    # HF-style extended additive padding mask: (1 - mask) * -10000, key axis.
    pad_bias = (1.0 - attention_mask.astype(jnp.float32)) * -10000.0  # (B, S)

    # Fused (P, P) additive mask for the packed block-diagonal attention.
    # Rows/cols are (head, batch, seq) head-major: group g = row // S.
    gid = jnp.arange(P) // S
    same = gid[:, None] == gid[None, :]
    col_bias = pad_bias[gid % B, jnp.arange(P) % S]                  # (P,)
    fused_mask = jnp.where(same, col_bias[None, :], jnp.float32(-1e9))

    hidden = encoder_stack(x, fused_mask, params["emb_ln"],
                           params["stacked"], B, S)
    cls = hidden.reshape(B, S, H)[:, 0, :]                          # (B, H)

    # Scorer head kept in plain JAX (1-lane kernel output = pure overhead).
    score = cls @ params["scorer_w"] + params["scorer_b"]           # (B, 1)
    return score[:, 0]                                              # squeeze(-1)


# --------------------------- parameter init ---------------------------------
def init_params(key):
    keys = iter(jax.random.split(key, 32))

    def normal(shape):
        return 0.02 * jax.random.normal(next(keys), shape, dtype=jnp.float32)

    H, I = HIDDEN, INTERMEDIATE
    wqkv_l, wo_l, w1_l, w2_l, small_l = [], [], [], [], []
    for _ in range(NUM_LAYERS):
        wq, wk, wv = normal((H, H)), normal((H, H)), normal((H, H))
        wqkv_l.append(jnp.concatenate([wq, wk, wv], axis=1))        # (H, 3H)
        wo_l.append(normal((H, H)))
        w1_l.append(normal((H, I)))
        w2_l.append(normal((I, H)))
        s = jnp.zeros((8, 3 * H), jnp.float32)
        s = s.at[_ROW_BQKV, :].set(jnp.zeros((3 * H,)))     # qkv bias
        s = s.at[_ROW_B1, :I].set(jnp.zeros((I,)))          # FFN-in bias
        s = s.at[_ROW_BO, :H].set(jnp.zeros((H,)))          # attn-out bias
        s = s.at[_ROW_LN1G, :H].set(jnp.ones((H,)))         # LN1 gamma
        s = s.at[_ROW_LN1B, :H].set(jnp.zeros((H,)))        # LN1 beta
        s = s.at[_ROW_B2, :H].set(jnp.zeros((H,)))          # FFN-out bias
        s = s.at[_ROW_LN2G, :H].set(jnp.ones((H,)))         # LN2 gamma
        s = s.at[_ROW_LN2B, :H].set(jnp.zeros((H,)))        # LN2 beta
        small_l.append(s)

    stacked = {
        "wqkv": jnp.stack(wqkv_l).astype(jnp.bfloat16),   # (L, H, 3H)
        "wo": jnp.stack(wo_l).astype(jnp.bfloat16),       # (L, H, H)
        "w1": jnp.stack(w1_l).astype(jnp.bfloat16),       # (L, H, I)
        "w2": jnp.stack(w2_l).astype(jnp.bfloat16),       # (L, I, H)
        "small": jnp.stack(small_l),                      # (L, 8, 3H) f32
    }

    return {
        "word_emb": normal((VOCAB, H)),
        "pos_emb": normal((MAX_POS, H)),
        "tok_emb": normal((TYPE_VOCAB, H)),
        "emb_ln": jnp.stack([jnp.ones((H,), jnp.float32),
                             jnp.zeros((H,), jnp.float32)], axis=0),  # (2, H)
        "scorer_w": normal((H, 1)),    # stored (in, out); y = x @ W + b
        "scorer_b": jnp.zeros((1,), jnp.float32),
        "stacked": stacked,
    }


# ------------------------------- main ----------------------------------------
if __name__ == "__main__":
    key = jax.random.PRNGKey(0)
    pkey, ikey = jax.random.split(key)
    params = init_params(pkey)

    B, S = 2, 16
    input_ids = jax.random.randint(ikey, (B, S), 0, VOCAB, dtype=jnp.int32)
    attention_mask = jnp.ones((B, S), jnp.int32).at[1, 12:].set(0)  # pad tail

    fwd = jax.jit(bert_for_reranking_forward)
    scores = jax.block_until_ready(fwd(params, input_ids, attention_mask))

    assert scores.shape == (B,) and scores.dtype == jnp.float32
    assert bool(jnp.all(jnp.isfinite(scores)))
    print("KERNEL_OK")
</pallas_src>

<mosaic_0001>
module attributes {stable_mosaic.version = 11 : i64} {
  func.func @_encoder_stack_kernel(%arg0: i32, %arg1: memref<32x128xf32, #tpu.memory_space<vmem>>, %arg2: memref<128x128xf32, #tpu.memory_space<vmem>>, %arg3: memref<2x128xf32, #tpu.memory_space<vmem>>, %arg4: memref<1x128x384xbf16, #tpu.memory_space<vmem>>, %arg5: memref<1x128x128xbf16, #tpu.memory_space<vmem>>, %arg6: memref<1x128x256xbf16, #tpu.memory_space<vmem>>, %arg7: memref<1x256x128xbf16, #tpu.memory_space<vmem>>, %arg8: memref<1x8x384xf32, #tpu.memory_space<vmem>>, %arg9: memref<32x128xf32, #tpu.memory_space<vmem>>) attributes {dimension_semantics = [#tpu.dimension_semantics<arbitrary>], iteration_bounds = array<i64: 2>, scalar_prefetch = 0 : i64, scratch_operands = 0 : i64, tpu.core_type = #tpu.core_type<tc>, window_params = [{pipeline_mode = #tpu.pipeline_mode<synchronous>, transform_indices = @transform_0, window_bounds = array<i64: 32, 128>}, {pipeline_mode = #tpu.pipeline_mode<synchronous>, transform_indices = @transform_1, window_bounds = array<i64: 128, 128>}, {pipeline_mode = #tpu.pipeline_mode<synchronous>, transform_indices = @transform_2, window_bounds = array<i64: 2, 128>}, {transform_indices = @transform_3, window_bounds = array<i64: 1, 128, 384>}, {transform_indices = @transform_4, window_bounds = array<i64: 1, 128, 128>}, {transform_indices = @transform_5, window_bounds = array<i64: 1, 128, 256>}, {transform_indices = @transform_6, window_bounds = array<i64: 1, 256, 128>}, {transform_indices = @transform_7, window_bounds = array<i64: 1, 8, 384>}, {pipeline_mode = #tpu.pipeline_mode<synchronous>, transform_indices = @transform_8, window_bounds = array<i64: 32, 128>}]} {
    %c0_i32 = arith.constant 0 : i32
    %0 = arith.cmpi eq, %arg0, %c0_i32 : i32
    %1 = arith.extui %0 : i1 to i32
    %c0_i32_0 = arith.constant 0 : i32
    %2 = arith.cmpi ne, %1, %c0_i32_0 : i32
    scf.if %2 {
      %c0_42 = arith.constant 0 : index
      %c0_43 = arith.constant 0 : index
      %129 = vector.load %arg1[%c0_42, %c0_43] : memref<32x128xf32, #tpu.memory_space<vmem>>, vector<32x128xf32>
      %c0_44 = arith.constant 0 : index
      %c0_45 = arith.constant 0 : index
      %130 = vector.load %arg3[%c0_44, %c0_45] : memref<2x128xf32, #tpu.memory_space<vmem>>, vector<1x128xf32>
      %c1 = arith.constant 1 : index
      %c0_46 = arith.constant 0 : index
      %131 = vector.load %arg3[%c1, %c0_46] : memref<2x128xf32, #tpu.memory_space<vmem>>, vector<1x128xf32>
      %cst_47 = arith.constant dense<0.000000e+00> : vector<32xf32>
      %132 = vector.multi_reduction <add>, %129, %cst_47 [1] : vector<32x128xf32> to vector<32xf32>
      %133 = vector.shape_cast %132 : vector<32xf32> to vector<32x1xf32>
      %cst_48 = arith.constant 1.280000e+02 : f32
      %134 = vector.broadcast %cst_48 : f32 to vector<32x1xf32>
      %135 = arith.divf %133, %134 : vector<32x1xf32>
      %136 = vector.broadcast %135 : vector<32x1xf32> to vector<32x128xf32>
      %137 = arith.subf %129, %136 : vector<32x128xf32>
      %138 = arith.mulf %137, %137 : vector<32x128xf32>
      %cst_49 = arith.constant dense<0.000000e+00> : vector<32xf32>
      %139 = vector.multi_reduction <add>, %138, %cst_49 [1] : vector<32x128xf32> to vector<32xf32>
      %140 = vector.shape_cast %139 : vector<32xf32> to vector<32x1xf32>
      %cst_50 = arith.constant 1.280000e+02 : f32
      %141 = vector.broadcast %cst_50 : f32 to vector<32x1xf32>
      %142 = arith.divf %140, %141 : vector<32x1xf32>
      %cst_51 = arith.constant 9.99999996E-13 : f32
      %143 = vector.broadcast %cst_51 : f32 to vector<32x1xf32>
      %144 = arith.addf %142, %143 : vector<32x1xf32>
      %145 = math.rsqrt %144 : vector<32x1xf32>
      %146 = vector.broadcast %145 : vector<32x1xf32> to vector<32x128xf32>
      %147 = arith.mulf %137, %146 : vector<32x128xf32>
      %148 = vector.broadcast %130 : vector<1x128xf32> to vector<32x128xf32>
      %149 = arith.mulf %147, %148 : vector<32x128xf32>
      %150 = vector.broadcast %131 : vector<1x128xf32> to vector<32x128xf32>
      %151 = arith.addf %149, %150 : vector<32x128xf32>
      %c0_52 = arith.constant 0 : index
      %c0_53 = arith.constant 0 : index
      %152 = vector.load %arg9[%c0_52, %c0_53] : memref<32x128xf32, #tpu.memory_space<vmem>>, vector<32x128xf32>
      tpu.vector_store %arg9[%c0_52, %c0_53], %151 {strides = array<i32>} : memref<32x128xf32, #tpu.memory_space<vmem>>, vector<32x128xf32>,
    } else {
    }
    %c0 = arith.constant 0 : index
    %c0_1 = arith.constant 0 : index
    %3 = vector.load %arg9[%c0, %c0_1] : memref<32x128xf32, #tpu.memory_space<vmem>>, vector<32x128xf32>
    %c0_2 = arith.constant 0 : index
    %c0_3 = arith.constant 0 : index
    %c0_4 = arith.constant 0 : index
    %4 = vector.load %arg8[%c0_2, %c0_3, %c0_4] : memref<1x8x384xf32, #tpu.memory_space<vmem>>, vector<1x8x384xf32>
    %5 = vector.shape_cast %4 : vector<1x8x384xf32> to vector<8x384xf32>
    %6 = arith.truncf %3 : vector<32x128xf32> to vector<32x128xbf16>
    %c0_5 = arith.constant 0 : index
    %c0_6 = arith.constant 0 : index
    %c0_7 = arith.constant 0 : index
    %7 = vector.load %arg4[%c0_5, %c0_6, %c0_7] : memref<1x128x384xbf16, #tpu.memory_space<vmem>>, vector<1x128x384xbf16>
    %8 = vector.shape_cast %7 : vector<1x128x384xbf16> to vector<128x384xbf16>
    %cst = arith.constant dense<0.000000e+00> : vector<32x384xf32>
    %9 = tpu.matmul %6, %8, %cst {dimension_numbers = #tpu.dot_dimension_numbers<[1], [0], [0], [1], [0, 0, 1, 1], [], []>} : vector<32x128xbf16>, vector<128x384xbf16>, vector<32x384xf32> -> vector<32x384xf32>
    %10 = vector.extract_strided_slice %5 {offsets = [0, 0], sizes = [1, 384], strides = [1, 1]} : vector<8x384xf32> to vector<1x384xf32>
    %11 = vector.broadcast %10 : vector<1x384xf32> to vector<32x384xf32>
    %12 = arith.addf %9, %11 : vector<32x384xf32>
    %13 = vector.extract_strided_slice %12 {offsets = [0, 0], sizes = [32, 32], strides = [1, 1]} : vector<32x384xf32> to vector<32x32xf32>
    %14 = vector.extract_strided_slice %12 {offsets = [0, 32], sizes = [32, 32], strides = [1, 1]} : vector<32x384xf32> to vector<32x32xf32>
    %15 = vector.extract_strided_slice %12 {offsets = [0, 64], sizes = [32, 32], strides = [1, 1]} : vector<32x384xf32> to vector<32x32xf32>
    %16 = vector.extract_strided_slice %12 {offsets = [0, 96], sizes = [32, 32], strides = [1, 1]} : vector<32x384xf32> to vector<32x32xf32>
    %17 = tpu.concatenate %13, %14, %15, %16 in 0 : vector<32x32xf32>, vector<32x32xf32>, vector<32x32xf32>, vector<32x32xf32> -> vector<128x32xf32>
    %18 = vector.extract_strided_slice %12 {offsets = [0, 128], sizes = [32, 32], strides = [1, 1]} : vector<32x384xf32> to vector<32x32xf32>
    %19 = vector.extract_strided_slice %12 {offsets = [0, 160], sizes = [32, 32], strides = [1, 1]} : vector<32x384xf32> to vector<32x32xf32>
    %20 = vector.extract_strided_slice %12 {offsets = [0, 192], sizes = [32, 32], strides = [1, 1]} : vector<32x384xf32> to vector<32x32xf32>
    %21 = vector.extract_strided_slice %12 {offsets = [0, 224], sizes = [32, 32], strides = [1, 1]} : vector<32x384xf32> to vector<32x32xf32>
    %22 = tpu.concatenate %18, %19, %20, %21 in 0 : vector<32x32xf32>, vector<32x32xf32>, vector<32x32xf32>, vector<32x32xf32> -> vector<128x32xf32>
    %23 = vector.extract_strided_slice %12 {offsets = [0, 256], sizes = [32, 32], strides = [1, 1]} : vector<32x384xf32> to vector<32x32xf32>
    %24 = vector.extract_strided_slice %12 {offsets = [0, 288], sizes = [32, 32], strides = [1, 1]} : vector<32x384xf32> to vector<32x32xf32>
    %25 = vector.extract_strided_slice %12 {offsets = [0, 320], sizes = [32, 32], strides = [1, 1]} : vector<32x384xf32> to vector<32x32xf32>
    %26 = vector.extract_strided_slice %12 {offsets = [0, 352], sizes = [32, 32], strides = [1, 1]} : vector<32x384xf32> to vector<32x32xf32>
    %27 = tpu.concatenate %23, %24, %25, %26 in 0 : vector<32x32xf32>, vector<32x32xf32>, vector<32x32xf32>, vector<32x32xf32> -> vector<128x32xf32>
    %28 = arith.truncf %17 : vector<128x32xf32> to vector<128x32xbf16>
    %29 = arith.truncf %22 : vector<128x32xf32> to vector<128x32xbf16>
    %cst_8 = arith.constant dense<0.000000e+00> : vector<128x128xf32>
    %30 = tpu.matmul %28, %29, %cst_8 {dimension_numbers = #tpu.dot_dimension_numbers<[1], [1], [0], [0], [0, 0, 1, 0], [], []>} : vector<128x32xbf16>, vector<128x32xbf16>, vector<128x128xf32> -> vector<128x128xf32>
    %cst_9 = arith.constant 0.176776692 : f32
    %31 = vector.broadcast %cst_9 : f32 to vector<128x128xf32>
    %32 = arith.mulf %30, %31 : vector<128x128xf32>
    %c0_10 = arith.constant 0 : index
    %c0_11 = arith.constant 0 : index
    %33 = vector.load %arg2[%c0_10, %c0_11] : memref<128x128xf32, #tpu.memory_space<vmem>>, vector<128x128xf32>
    %34 = arith.addf %32, %33 : vector<128x128xf32>
    %cst_12 = arith.constant dense<0xFF800000> : vector<128xf32>
    %35 = vector.multi_reduction <maximumf>, %34, %cst_12 [1] : vector<128x128xf32> to vector<128xf32>
    %36 = vector.shape_cast %35 : vector<128xf32> to vector<128x1xf32>
    %37 = vector.broadcast %36 : vector<128x1xf32> to vector<128x128xf32>
    %38 = arith.subf %34, %37 : vector<128x128xf32>
    %39 = math.exp %38 : vector<128x128xf32>
    %cst_13 = arith.constant dense<0.000000e+00> : vector<128xf32>
    %40 = vector.multi_reduction <add>, %39, %cst_13 [1] : vector<128x128xf32> to vector<128xf32>
    %41 = vector.shape_cast %40 : vector<128xf32> to vector<128x1xf32>
    %42 = tpu.reciprocal %41 {approx = true} : vector<128x1xf32> -> vector<128x1xf32>
    %43 = vector.broadcast %42 : vector<128x1xf32> to vector<128x128xf32>
    %44 = arith.mulf %39, %43 : vector<128x128xf32>
    %45 = arith.truncf %44 : vector<128x128xf32> to vector<128x128xbf16>
    %46 = arith.truncf %27 : vector<128x32xf32> to vector<128x32xbf16>
    %cst_14 = arith.constant dense<0.000000e+00> : vector<128x32xf32>
    %47 = tpu.matmul %45, %46, %cst_14 {dimension_numbers = #tpu.dot_dimension_numbers<[1], [0], [0], [1], [0, 0, 1, 1], [], []>} : vector<128x128xbf16>, vector<128x32xbf16>, vector<128x32xf32> -> vector<128x32xf32>
    %48 = vector.extract_strided_slice %47 {offsets = [0, 0], sizes = [32, 32], strides = [1, 1]} : vector<128x32xf32> to vector<32x32xf32>
    %49 = vector.extract_strided_slice %47 {offsets = [32, 0], sizes = [32, 32], strides = [1, 1]} : vector<128x32xf32> to vector<32x32xf32>
    %50 = vector.extract_strided_slice %47 {offsets = [64, 0], sizes = [32, 32], strides = [1, 1]} : vector<128x32xf32> to vector<32x32xf32>
    %51 = vector.extract_strided_slice %47 {offsets = [96, 0], sizes = [32, 32], strides = [1, 1]} : vector<128x32xf32> to vector<32x32xf32>
    %52 = tpu.concatenate %48, %49, %50, %51 in 1 : vector<32x32xf32>, vector<32x32xf32>, vector<32x32xf32>, vector<32x32xf32> -> vector<32x128xf32>
    %53 = arith.truncf %52 : vector<32x128xf32> to vector<32x128xbf16>
    %c0_15 = arith.constant 0 : index
    %c0_16 = arith.constant 0 : index
    %c0_17 = arith.constant 0 : index
    %54 = vector.load %arg5[%c0_15, %c0_16, %c0_17] : memref<1x128x128xbf16, #tpu.memory_space<vmem>>, vector<1x128x128xbf16>
    %55 = vector.shape_cast %54 : vector<1x128x128xbf16> to vector<128x128xbf16>
    %cst_18 = arith.constant dense<0.000000e+00> : vector<32x128xf32>
    %56 = tpu.matmul %53, %55, %cst_18 {dimension_numbers = #tpu.dot_dimension_numbers<[1], [0], [0], [1], [0, 0, 1, 1], [], []>} : vector<32x128xbf16>, vector<128x128xbf16>, vector<32x128xf32> -> vector<32x128xf32>
    %57 = vector.extract_strided_slice %5 {offsets = [2, 0], sizes = [1, 128], strides = [1, 1]} : vector<8x384xf32> to vector<1x128xf32>
    %58 = vector.broadcast %57 : vector<1x128xf32> to vector<32x128xf32>
    %59 = arith.addf %56, %58 : vector<32x128xf32>
    %60 = arith.addf %59, %3 : vector<32x128xf32>
    %61 = vector.extract_strided_slice %5 {offsets = [3, 0], sizes = [1, 128], strides = [1, 1]} : vector<8x384xf32> to vector<1x128xf32>
    %62 = vector.extract_strided_slice %5 {offsets = [4, 0], sizes = [1, 128], strides = [1, 1]} : vector<8x384xf32> to vector<1x128xf32>
    %cst_19 = arith.constant dense<0.000000e+00> : vector<32xf32>
    %63 = vector.multi_reduction <add>, %60, %cst_19 [1] : vector<32x128xf32> to vector<32xf32>
    %64 = vector.shape_cast %63 : vector<32xf32> to vector<32x1xf32>
    %cst_20 = arith.constant 1.280000e+02 : f32
    %65 = vector.broadcast %cst_20 : f32 to vector<32x1xf32>
    %66 = arith.divf %64, %65 : vector<32x1xf32>
    %67 = vector.broadcast %66 : vector<32x1xf32> to vector<32x128xf32>
    %68 = arith.subf %60, %67 : vector<32x128xf32>
    %69 = arith.mulf %68, %68 : vector<32x128xf32>
    %cst_21 = arith.constant dense<0.000000e+00> : vector<32xf32>
    %70 = vector.multi_reduction <add>, %69, %cst_21 [1] : vector<32x128xf32> to vector<32xf32>
    %71 = vector.shape_cast %70 : vector<32xf32> to vector<32x1xf32>
    %cst_22 = arith.constant 1.280000e+02 : f32
    %72 = vector.broadcast %cst_22 : f32 to vector<32x1xf32>
    %73 = arith.divf %71, %72 : vector<32x1xf32>
    %cst_23 = arith.constant 9.99999996E-13 : f32
    %74 = vector.broadcast %cst_23 : f32 to vector<32x1xf32>
    %75 = arith.addf %73, %74 : vector<32x1xf32>
    %76 = math.rsqrt %75 : vector<32x1xf32>
    %77 = vector.broadcast %76 : vector<32x1xf32> to vector<32x128xf32>
    %78 = arith.mulf %68, %77 : vector<32x128xf32>
    %79 = vector.broadcast %61 : vector<1x128xf32> to vector<32x128xf32>
    %80 = arith.mulf %78, %79 : vector<32x128xf32>
    %81 = vector.broadcast %62 : vector<1x128xf32> to vector<32x128xf32>
    %82 = arith.addf %80, %81 : vector<32x128xf32>
    %83 = arith.truncf %82 : vector<32x128xf32> to vector<32x128xbf16>
    %c0_24 = arith.constant 0 : index
    %c0_25 = arith.constant 0 : index
    %c0_26 = arith.constant 0 : index
    %84 = vector.load %arg6[%c0_24, %c0_25, %c0_26] : memref<1x128x256xbf16, #tpu.memory_space<vmem>>, vector<1x128x256xbf16>
    %85 = vector.shape_cast %84 : vector<1x128x256xbf16> to vector<128x256xbf16>
    %cst_27 = arith.constant dense<0.000000e+00> : vector<32x256xf32>
    %86 = tpu.matmul %83, %85, %cst_27 {dimension_numbers = #tpu.dot_dimension_numbers<[1], [0], [0], [1], [0, 0, 1, 1], [], []>} : vector<32x128xbf16>, vector<128x256xbf16>, vector<32x256xf32> -> vector<32x256xf32>
    %87 = vector.extract_strided_slice %5 {offsets = [1, 0], sizes = [1, 256], strides = [1, 1]} : vector<8x384xf32> to vector<1x256xf32>
    %88 = vector.broadcast %87 : vector<1x256xf32> to vector<32x256xf32>
    %89 = arith.addf %86, %88 : vector<32x256xf32>
    %cst_28 = arith.constant 5.000000e-01 : f32
    %90 = vector.broadcast %cst_28 : f32 to vector<32x256xf32>
    %91 = arith.mulf %90, %89 : vector<32x256xf32>
    %cst_29 = arith.constant 0.707106769 : f32
    %92 = vector.broadcast %cst_29 : f32 to vector<32x256xf32>
    %93 = arith.mulf %89, %92 : vector<32x256xf32>
    %94 = math.erf %93 : vector<32x256xf32>
    %cst_30 = arith.constant 1.000000e+00 : f32
    %95 = vector.broadcast %cst_30 : f32 to vector<32x256xf32>
    %96 = arith.addf %95, %94 : vector<32x256xf32>
    %97 = arith.mulf %91, %96 : vector<32x256xf32>
    %98 = arith.truncf %97 : vector<32x256xf32> to vector<32x256xbf16>
    %c0_31 = arith.constant 0 : index
    %c0_32 = arith.constant 0 : index
    %c0_33 = arith.constant 0 : index
    %99 = vector.load %arg7[%c0_31, %c0_32, %c0_33] : memref<1x256x128xbf16, #tpu.memory_space<vmem>>, vector<1x256x128xbf16>
    %100 = vector.shape_cast %99 : vector<1x256x128xbf16> to vector<256x128xbf16>
    %cst_34 = arith.constant dense<0.000000e+00> : vector<32x128xf32>
    %101 = tpu.matmul %98, %100, %cst_34 {dimension_numbers = #tpu.dot_dimension_numbers<[1], [0], [0], [1], [0, 0, 1, 1], [], []>} : vector<32x256xbf16>, vector<256x128xbf16>, vector<32x128xf32> -> vector<32x128xf32>
    %102 = vector.extract_strided_slice %5 {offsets = [5, 0], sizes = [1, 128], strides = [1, 1]} : vector<8x384xf32> to vector<1x128xf32>
    %103 = vector.broadcast %102 : vector<1x128xf32> to vector<32x128xf32>
    %104 = arith.addf %101, %103 : vector<32x128xf32>
    %105 = arith.addf %104, %82 : vector<32x128xf32>
    %106 = vector.extract_strided_slice %5 {offsets = [6, 0], sizes = [1, 128], strides = [1, 1]} : vector<8x384xf32> to vector<1x128xf32>
    %107 = vector.extract_strided_slice %5 {offsets = [7, 0], sizes = [1, 128], strides = [1, 1]} : vector<8x384xf32> to vector<1x128xf32>
    %cst_35 = arith.constant dense<0.000000e+00> : vector<32xf32>
    %108 = vector.multi_reduction <add>, %105, %cst_35 [1] : vector<32x128xf32> to vector<32xf32>
    %109 = vector.shape_cast %108 : vector<32xf32> to vector<32x1xf32>
    %cst_36 = arith.constant 1.280000e+02 : f32
    %110 = vector.broadcast %cst_36 : f32 to vector<32x1xf32>
    %111 = arith.divf %109, %110 : vector<32x1xf32>
    %112 = vector.broadcast %111 : vector<32x1xf32> to vector<32x128xf32>
    %113 = arith.subf %105, %112 : vector<32x128xf32>
    %114 = arith.mulf %113, %113 : vector<32x128xf32>
    %cst_37 = arith.constant dense<0.000000e+00> : vector<32xf32>
    %115 = vector.multi_reduction <add>, %114, %cst_37 [1] : vector<32x128xf32> to vector<32xf32>
    %116 = vector.shape_cast %115 : vector<32xf32> to vector<32x1xf32>
    %cst_38 = arith.constant 1.280000e+02 : f32
    %117 = vector.broadcast %cst_38 : f32 to vector<32x1xf32>
    %118 = arith.divf %116, %117 : vector<32x1xf32>
    %cst_39 = arith.constant 9.99999996E-13 : f32
    %119 = vector.broadcast %cst_39 : f32 to vector<32x1xf32>
    %120 = arith.addf %118, %119 : vector<32x1xf32>
    %121 = math.rsqrt %120 : vector<32x1xf32>
    %122 = vector.broadcast %121 : vector<32x1xf32> to vector<32x128xf32>
    %123 = arith.mulf %113, %122 : vector<32x128xf32>
    %124 = vector.broadcast %106 : vector<1x128xf32> to vector<32x128xf32>
    %125 = arith.mulf %123, %124 : vector<32x128xf32>
    %126 = vector.broadcast %107 : vector<1x128xf32> to vector<32x128xf32>
    %127 = arith.addf %125, %126 : vector<32x128xf32>
    %c0_40 = arith.constant 0 : index
    %c0_41 = arith.constant 0 : index
    %128 = vector.load %arg9[%c0_40, %c0_41] : memref<32x128xf32, #tpu.memory_space<vmem>>, vector<32x128xf32>
    tpu.vector_store %arg9[%c0_40, %c0_41], %127 {strides = array<i32>} : memref<32x128xf32, #tpu.memory_space<vmem>>, vector<32x128xf32>,
    return
  }
  func.func @transform_0(%arg0: i32) -> (i32, i32) {
    %c0_i32 = arith.constant 0 : i32
    %c0_i32_0 = arith.constant 0 : i32
    %c0_i32_1 = arith.constant 0 : i32
    return %c0_i32, %c0_i32_0 : i32, i32
  }
  func.func @transform_1(%arg0: i32) -> (i32, i32) {
    %c0_i32 = arith.constant 0 : i32
    %c0_i32_0 = arith.constant 0 : i32
    %c0_i32_1 = arith.constant 0 : i32
    return %c0_i32, %c0_i32_0 : i32, i32
  }
  func.func @transform_2(%arg0: i32) -> (i32, i32) {
    %c0_i32 = arith.constant 0 : i32
    %c0_i32_0 = arith.constant 0 : i32
    %c0_i32_1 = arith.constant 0 : i32
    return %c0_i32, %c0_i32_0 : i32, i32
  }
  func.func @transform_3(%arg0: i32) -> (i32, i32, i32) {
    %c0_i32 = arith.constant 0 : i32
    %c0_i32_0 = arith.constant 0 : i32
    %c0_i32_1 = arith.constant 0 : i32
    return %arg0, %c0_i32, %c0_i32_0 : i32, i32, i32
  }
  func.func @transform_4(%arg0: i32) -> (i32, i32, i32) {
    %c0_i32 = arith.constant 0 : i32
    %c0_i32_0 = arith.constant 0 : i32
    %c0_i32_1 = arith.constant 0 : i32
    return %arg0, %c0_i32, %c0_i32_0 : i32, i32, i32
  }
  func.func @transform_5(%arg0: i32) -> (i32, i32, i32) {
    %c0_i32 = arith.constant 0 : i32
    %c0_i32_0 = arith.constant 0 : i32
    %c0_i32_1 = arith.constant 0 : i32
    return %arg0, %c0_i32, %c0_i32_0 : i32, i32, i32
  }
  func.func @transform_6(%arg0: i32) -> (i32, i32, i32) {
    %c0_i32 = arith.constant 0 : i32
    %c0_i32_0 = arith.constant 0 : i32
    %c0_i32_1 = arith.constant 0 : i32
    return %arg0, %c0_i32, %c0_i32_0 : i32, i32, i32
  }
  func.func @transform_7(%arg0: i32) -> (i32, i32, i32) {
    %c0_i32 = arith.constant 0 : i32
    %c0_i32_0 = arith.constant 0 : i32
    %c0_i32_1 = arith.constant 0 : i32
    return %arg0, %c0_i32, %c0_i32_0 : i32, i32, i32
  }
  func.func @transform_8(%arg0: i32) -> (i32, i32) {
    %c0_i32 = arith.constant 0 : i32
    %c0_i32_0 = arith.constant 0 : i32
    %c0_i32_1 = arith.constant 0 : i32
    return %c0_i32, %c0_i32_0 : i32, i32
  }
}

</mosaic_0001>

<llo_original>
// kernel: bert_for_reranking_forward.1
$region0: #{bert_for_reranking_forward.1}
  #allocation0 [shape = 'u32[]', space=smem, size = 0x4, offset = 0x4, fixed_abs, tag = 'smem constant byte address 0x4 - core index']
  #allocation1 [shape = 'u32[72,128]{1,0:T(1,128)}', space=vmem, size = 0x9000, scoped, tag = 'internal scratch']
  %s0 = inlined_call_operand.vmem [shape: f32[32,128], index: 0, kind: input, shape index: {}]
  %s1 = inlined_call_operand.vmem [shape: f32[128,128], index: 1, kind: input, shape index: {}]
  %s2 = inlined_call_operand.vmem [shape: f32[2,128], index: 2, kind: input, shape index: {}]
  %s3 = inlined_call_operand.vmem [shape: bf16[2,128,384], index: 3, kind: input, shape index: {}]
  %s4 = inlined_call_operand.vmem [shape: bf16[2,128,128], index: 4, kind: input, shape index: {}]
  %s5 = inlined_call_operand.vmem [shape: bf16[2,128,256], index: 5, kind: input, shape index: {}]
  %s6 = inlined_call_operand.vmem [shape: bf16[2,256,128], index: 6, kind: input, shape index: {}]
  %s7 = inlined_call_operand.vmem [shape: f32[2,8,384], index: 7, kind: input, shape index: {}]
  %s8 = inlined_call_operand.vmem [shape: f32[32,128], index: 8, kind: output, shape index: {}]
  %s9 = sld [smem:[#allocation0]]
  $region69: #{bert_for_reranking_forward.1} parent=0
    _
  %s11 = ssub.s32 1, %s9
  %s12 = scalar_select 0, %s11, %s9
  loop: start=0, step=1, limit=4
  $region2: #{bert_for_reranking_forward.1} parent=0 // loop_pre_header
    _
  $region3: #{bert_for_reranking_forward.1} parent=0 // loop_header
    %s14 = sphi 0, %s18
    %p15 = scmp.ge.s32.totalorder %s14, 4
    %s22 = sphi 0, %s22
    %s24 = sphi 0, %s22
    %s25 = sphi 0, %s24
    %s39 = sphi 0, %s25
    %s43 = sphi 0, %s43
    %s45 = sphi 0, %s43
    %s46 = sphi 0, %s45
    %s60 = sphi 0, %s46
    %s64 = sphi 0, %s64
    %s66 = sphi 0, %s64
    %s67 = sphi 0, %s66
    %s81 = sphi 0, %s67
    %s87 = sphi 0, %s89
    %s90 = sphi 0, %s87
    %s91 = sphi 0, %s90
    %s107 = sphi 0, %s91
    %s113 = sphi 0, %s115
    %s116 = sphi 0, %s113
    %s117 = sphi 0, %s116
    %s133 = sphi 0, %s117
    %s139 = sphi 0, %s141
    %s142 = sphi 0, %s139
    %s143 = sphi 0, %s142
    %s159 = sphi 0, %s143
    %s165 = sphi 0, %s167
    %s168 = sphi 0, %s165
    %s169 = sphi 0, %s168
    %s185 = sphi 0, %s169
    %s191 = sphi 0, %s193
    %s194 = sphi 0, %s191
    %s195 = sphi 0, %s194
    %s211 = sphi 0, %s195
    %s215 = sphi 0, %s215
    %s217 = sphi 0, %s215
    %s218 = sphi 0, %s217
    %s232 = sphi 0, %s218
  $region4: #{bert_for_reranking_forward.1} parent=0 // loop_header_branch
    %17 = sbr.rel (%p15) target = $region8
  $region5: #{bert_for_reranking_forward.1} parent=0 // loop_body
    %s19 = ssub.s32 %s14, 1
    %s20 = ssub.s32 %s14, 2
    %s21 = sadd.s32 %s14, 1
    %s23 = sadd.s32 %s22, 1
    %p26 = scmp.eq.s32.totalorder %s14, 1
    %p27 = scmp.ne.s32.totalorder %s22, %s24
    %p28 = scmp.eq.s32.totalorder %s14, 0
    %p29 = por %p27, %p28
    %p30 = scmp.ne.s32.totalorder %s22, %s24
    %p31 = scmp.eq.s32.totalorder %s19, 1
    %p32 = por %p30, %p31
    %p33 = scmp.ne.s32.totalorder %s24, %s25
    %p34 = scmp.eq.s32.totalorder %s19, 0
    %p35 = por %p33, %p34
    %p36 = scmp.ne.s32.totalorder %s24, %s25
    %p37 = scmp.eq.s32.totalorder %s20, 1
    %p38 = por %p36, %p37
    %p40 = scmp.ne.s32.totalorder %s25, %s39
    %p41 = scmp.eq.s32.totalorder %s20, 0
    %p42 = por %p40, %p41
    %s44 = sadd.s32 %s43, 1
    %p47 = scmp.eq.s32.totalorder %s14, 1
    %p48 = scmp.ne.s32.totalorder %s43, %s45
    %p49 = scmp.eq.s32.totalorder %s14, 0
    %p50 = por %p48, %p49
    %p51 = scmp.ne.s32.totalorder %s43, %s45
    %p52 = scmp.eq.s32.totalorder %s19, 1
    %p53 = por %p51, %p52
    %p54 = scmp.ne.s32.totalorder %s45, %s46
    %p55 = scmp.eq.s32.totalorder %s19, 0
    %p56 = por %p54, %p55
    %p57 = scmp.ne.s32.totalorder %s45, %s46
    %p58 = scmp.eq.s32.totalorder %s20, 1
    %p59 = por %p57, %p58
    %p61 = scmp.ne.s32.totalorder %s46, %s60
    %p62 = scmp.eq.s32.totalorder %s20, 0
    %p63 = por %p61, %p62
    %s65 = sadd.s32 %s64, 1
    %p68 = scmp.eq.s32.totalorder %s14, 1
    %p69 = scmp.ne.s32.totalorder %s64, %s66
    %p70 = scmp.eq.s32.totalorder %s14, 0
    %p71 = por %p69, %p70
    %p72 = scmp.ne.s32.totalorder %s64, %s66
    %p73 = scmp.eq.s32.totalorder %s19, 1
    %p74 = por %p72, %p73
    %p75 = scmp.ne.s32.totalorder %s66, %s67
    %p76 = scmp.eq.s32.totalorder %s19, 0
    %p77 = por %p75, %p76
    %p78 = scmp.ne.s32.totalorder %s66, %s67
    %p79 = scmp.eq.s32.totalorder %s20, 1
    %p80 = por %p78, %p79
    %p82 = scmp.ne.s32.totalorder %s67, %s81
    %p83 = scmp.eq.s32.totalorder %s20, 0
    %p84 = por %p82, %p83
    %s85 = ssub.s32 %s14, %s21
    %p86 = scmp.eq.s32.totalorder %s85, 0
    %s88 = sadd.s32 %s87, 1
    %s89 = scalar_select %p86, %s87, %s88
    %p92 = pneg %p86
    %p93 = scmp.eq.s32.totalorder %s14, 1
    %p94 = por %p92, %p93
    %p95 = scmp.ne.s32.totalorder %s87, %s90
    %p96 = scmp.eq.s32.totalorder %s14, 0
    %p97 = por %p95, %p96
    %p98 = scmp.ne.s32.totalorder %s87, %s90
    %p99 = scmp.eq.s32.totalorder %s19, 1
    %p100 = por %p98, %p99
    %p101 = scmp.ne.s32.totalorder %s90, %s91
    %p102 = scmp.eq.s32.totalorder %s19, 0
    %p103 = por %p101, %p102
    %p104 = scmp.ne.s32.totalorder %s90, %s91
    %p105 = scmp.eq.s32.totalorder %s20, 1
    %p106 = por %p104, %p105
    %p108 = scmp.ne.s32.totalorder %s91, %s107
    %p109 = scmp.eq.s32.totalorder %s20, 0
    %p110 = por %p108, %p109
    %s111 = ssub.s32 %s14, %s21
    %p112 = scmp.eq.s32.totalorder %s111, 0
    %s114 = sadd.s32 %s113, 1
    %s115 = scalar_select %p112, %s113, %s114
    %p118 = pneg %p112
    %p119 = scmp.eq.s32.totalorder %s14, 1
    %p120 = por %p118, %p119
    %p121 = scmp.ne.s32.totalorder %s113, %s116
    %p122 = scmp.eq.s32.totalorder %s14, 0
    %p123 = por %p121, %p122
    %p124 = scmp.ne.s32.totalorder %s113, %s116
    %p125 = scmp.eq.s32.totalorder %s19, 1
    %p126 = por %p124, %p125
    %p127 = scmp.ne.s32.totalorder %s116, %s117
    %p128 = scmp.eq.s32.totalorder %s19, 0
    %p129 = por %p127, %p128
    %p130 = scmp.ne.s32.totalorder %s116, %s117
    %p131 = scmp.eq.s32.totalorder %s20, 1
    %p132 = por %p130, %p131
    %p134 = scmp.ne.s32.totalorder %s117, %s133
    %p135 = scmp.eq.s32.totalorder %s20, 0
    %p136 = por %p134, %p135
    %s137 = ssub.s32 %s14, %s21
    %p138 = scmp.eq.s32.totalorder %s137, 0
    %s140 = sadd.s32 %s139, 1
    %s141 = scalar_select %p138, %s139, %s140
    %p144 = pneg %p138
    %p145 = scmp.eq.s32.totalorder %s14, 1
    %p146 = por %p144, %p145
    %p147 = scmp.ne.s32.totalorder %s139, %s142
    %p148 = scmp.eq.s32.totalorder %s14, 0
    %p149 = por %p147, %p148
    %p150 = scmp.ne.s32.totalorder %s139, %s142
    %p151 = scmp.eq.s32.totalorder %s19, 1
    %p152 = por %p150, %p151
    %p153 = scmp.ne.s32.totalorder %s142, %s143
    %p154 = scmp.eq.s32.totalorder %s19, 0
    %p155 = por %p153, %p154
    %p156 = scmp.ne.s32.totalorder %s142, %s143
    %p157 = scmp.eq.s32.totalorder %s20, 1
    %p158 = por %p156, %p157
    %p160 = scmp.ne.s32.totalorder %s143, %s159
    %p161 = scmp.eq.s32.totalorder %s20, 0
    %p162 = por %p160, %p161
    %s163 = ssub.s32 %s14, %s21
    %p164 = scmp.eq.s32.totalorder %s163, 0
    %s166 = sadd.s32 %s165, 1
    %s167 = scalar_select %p164, %s165, %s166
    %p170 = pneg %p164
    %p171 = scmp.eq.s32.totalorder %s14, 1
    %p172 = por %p170, %p171
    %p173 = scmp.ne.s32.totalorder %s165, %s168
    %p174 = scmp.eq.s32.totalorder %s14, 0
    %p175 = por %p173, %p174
    %p176 = scmp.ne.s32.totalorder %s165, %s168
    %p177 = scmp.eq.s32.totalorder %s19, 1
    %p178 = por %p176, %p177
    %p179 = scmp.ne.s32.totalorder %s168, %s169
    %p180 = scmp.eq.s32.totalorder %s19, 0
    %p181 = por %p179, %p180
    %p182 = scmp.ne.s32.totalorder %s168, %s169
    %p183 = scmp.eq.s32.totalorder %s20, 1
    %p184 = por %p182, %p183
    %p186 = scmp.ne.s32.totalorder %s169, %s185
    %p187 = scmp.eq.s32.totalorder %s20, 0
    %p188 = por %p186, %p187
    %s189 = ssub.s32 %s14, %s21
    %p190 = scmp.eq.s32.totalorder %s189, 0
    %s192 = sadd.s32 %s191, 1
    %s193 = scalar_select %p190, %s191, %s192
    %p196 = pneg %p190
    %p197 = scmp.eq.s32.totalorder %s14, 1
    %p198 = por %p196, %p197
    %p199 = scmp.ne.s32.totalorder %s191, %s194
    %p200 = scmp.eq.s32.totalorder %s14, 0
    %p201 = por %p199, %p200
    %p202 = scmp.ne.s32.totalorder %s191, %s194
    %p203 = scmp.eq.s32.totalorder %s19, 1
    %p204 = por %p202, %p203
    %p205 = scmp.ne.s32.totalorder %s194, %s195
    %p206 = scmp.eq.s32.totalorder %s19, 0
    %p207 = por %p205, %p206
    %p208 = scmp.ne.s32.totalorder %s194, %s195
    %p209 = scmp.eq.s32.totalorder %s20, 1
    %p210 = por %p208, %p209
    %p212 = scmp.ne.s32.totalorder %s195, %s211
    %p213 = scmp.eq.s32.totalorder %s20, 0
    %p214 = por %p212, %p213
    %s216 = sadd.s32 %s215, 1
    %p219 = scmp.eq.s32.totalorder %s14, 1
    %p220 = scmp.ne.s32.totalorder %s215, %s217
    %p221 = scmp.eq.s32.totalorder %s14, 0
    %p222 = por %p220, %p221
    %p223 = scmp.ne.s32.totalorder %s215, %s217
    %p224 = scmp.eq.s32.totalorder %s19, 1
    %p225 = por %p223, %p224
    %p226 = scmp.ne.s32.totalorder %s217, %s218
    %p227 = scmp.eq.s32.totalorder %s19, 0
    %p228 = por %p226, %p227
    %p229 = scmp.ne.s32.totalorder %s217, %s218
    %p230 = scmp.eq.s32.totalorder %s20, 1
    %p231 = por %p229, %p230
    %p233 = scmp.ne.s32.totalorder %s218, %s232
    %p234 = scmp.eq.s32.totalorder %s20, 0
    %p235 = por %p233, %p234
    %p236 = scmp.le.s32.totalorder 1, %s14
    %p237 = scmp.lt.s32.totalorder %s14, 3
    %p238 = pnand %p236, %p237
    %p239 = pneg %p238
    // Predicated region
    $region9: #{bert_for_reranking_forward.1} parent=5 // pred_check
      _
    $region10: #{bert_for_reranking_forward.1} parent=5 // pred_check_branch
      %241 = sbr.rel (%p238) target = $region12
    $region11: #{bert_for_reranking_forward.1} parent=5 // pred_region
      %s242 = ssub.s32 %s14, 1
      // Predicated region
      $region13: #{bert_for_reranking_forward.1} parent=11 // pred_check
        %p243 = pneg %p35
      $region14: #{bert_for_reranking_forward.1} parent=11 // pred_check_branch
        %245 = sbr.rel (%p243) target = $region16
      $region15: #{bert_for_reranking_forward.1} parent=11 // pred_region
        _
      $region16: #{bert_for_reranking_forward.1} parent=11 // pred_fallthru
        _
      // Predicated region
      $region17: #{bert_for_reranking_forward.1} parent=11 // pred_check
        %p246 = pneg %p56
      $region18: #{bert_for_reranking_forward.1} parent=11 // pred_check_branch
        %248 = sbr.rel (%p246) target = $region20
      $region19: #{bert_for_reranking_forward.1} parent=11 // pred_region
        _
      $region20: #{bert_for_reranking_forward.1} parent=11 // pred_fallthru
        _
      // Predicated region
      $region21: #{bert_for_reranking_forward.1} parent=11 // pred_check
        %p249 = pneg %p77
      $region22: #{bert_for_reranking_forward.1} parent=11 // pred_check_branch
        %251 = sbr.rel (%p249) target = $region24
      $region23: #{bert_for_reranking_forward.1} parent=11 // pred_region
        _
      $region24: #{bert_for_reranking_forward.1} parent=11 // pred_fallthru
        _
    $region12: #{bert_for_reranking_forward.1} parent=5 // pred_fallthru
      _
    %p252 = scmp.lt.s32.totalorder %s14, 2
    // Predicated region
    $region25: #{bert_for_reranking_forward.1} parent=5 // pred_check
      %p253 = pneg %p252
    $region26: #{bert_for_reranking_forward.1} parent=5 // pred_check_branch
      %255 = sbr.rel (%p253) target = $region28
    $region27: #{bert_for_reranking_forward.1} parent=5 // pred_region
      // Predicated region
      $region29: #{bert_for_reranking_forward.1} parent=27 // pred_check
        %p256 = pneg %p97
      $region30: #{bert_for_reranking_forward.1} parent=27 // pred_check_branch
        %258 = sbr.rel (%p256) target = $region32
      $region31: #{bert_for_reranking_forward.1} parent=27 // pred_region
        %p259 = scmp.lt.s32.totalorder %s14, 1
        %s260 = scalar_select %p259, %s14, 1
        %s261 = smul.addr %s260, 48
        %s262 = smul.addr %s261, 4
        %s263 = scalar_lea.vmem %s3, %s262
      $region32: #{bert_for_reranking_forward.1} parent=27 // pred_fallthru
        _
      // Predicated region
      $region33: #{bert_for_reranking_forward.1} parent=27 // pred_check
        %p264 = pneg %p123
      $region34: #{bert_for_reranking_forward.1} parent=27 // pred_check_branch
        %266 = sbr.rel (%p264) target = $region36
      $region35: #{bert_for_reranking_forward.1} parent=27 // pred_region
        %p267 = scmp.lt.s32.totalorder %s14, 1
        %s268 = scalar_select %p267, %s14, 1
        %s269 = smul.addr %s268, 16
        %s270 = smul.addr %s269, 4
        %s271 = scalar_lea.vmem %s4, %s270
      $region36: #{bert_for_reranking_forward.1} parent=27 // pred_fallthru
        _
      // Predicated region
      $region37: #{bert_for_reranking_forward.1} parent=27 // pred_check
        %p272 = pneg %p149
      $region38: #{bert_for_reranking_forward.1} parent=27 // pred_check_branch
        %274 = sbr.rel (%p272) target = $region40
      $region39: #{bert_for_reranking_forward.1} parent=27 // pred_region
        %p275 = scmp.lt.s32.totalorder %s14, 1
        %s276 = scalar_select %p275, %s14, 1
        %s277 = smul.addr %s276, 32
        %s278 = smul.addr %s277, 4
        %s279 = scalar_lea.vmem %s5, %s278
      $region40: #{bert_for_reranking_forward.1} parent=27 // pred_fallthru
        _
      // Predicated region
      $region41: #{bert_for_reranking_forward.1} parent=27 // pred_check
        %p280 = pneg %p175
      $region42: #{bert_for_reranking_forward.1} parent=27 // pred_check_branch
        %282 = sbr.rel (%p280) target = $region44
      $region43: #{bert_for_reranking_forward.1} parent=27 // pred_region
        %p283 = scmp.lt.s32.totalorder %s14, 1
        %s284 = scalar_select %p283, %s14, 1
        %s285 = smul.addr %s284, 32
        %s286 = smul.addr %s285, 4
        %s287 = scalar_lea.vmem %s6, %s286
      $region44: #{bert_for_reranking_forward.1} parent=27 // pred_fallthru
        _
      // Predicated region
      $region45: #{bert_for_reranking_forward.1} parent=27 // pred_check
        %p288 = pneg %p201
      $region46: #{bert_for_reranking_forward.1} parent=27 // pred_check_branch
        %290 = sbr.rel (%p288) target = $region48
      $region47: #{bert_for_reranking_forward.1} parent=27 // pred_region
        %p291 = scmp.lt.s32.totalorder %s14, 1
        %s292 = scalar_select %p291, %s14, 1
        %s293 = smul.addr %s292, 3
        %s294 = smul.addr %s293, 8
        %s295 = scalar_lea.vmem %s7, %s294
      $region48: #{bert_for_reranking_forward.1} parent=27 // pred_fallthru
        _
    $region28: #{bert_for_reranking_forward.1} parent=5 // pred_fallthru
      _
    %p296 = scmp.le.s32.totalorder 1, %s14
    %p297 = scmp.lt.s32.totalorder %s14, 3
    %p298 = pnand %p296, %p297
    %p299 = pneg %p298
    // Predicated region
    $region49: #{bert_for_reranking_forward.1} parent=5 // pred_check
      _
    $region50: #{bert_for_reranking_forward.1} parent=5 // pred_check_branch
      %301 = sbr.rel (%p298) target = $region52
    $region51: #{bert_for_reranking_forward.1} parent=5 // pred_region
      %s302 = ssub.s32 %s14, 1
      %p303 = pneg %p35
      %p304 = pneg %p32
      %p305 = pneg %p56
      %p306 = pneg %p53
      %p307 = pneg %p77
      %p308 = pneg %p74
      %p309 = scmp.lt.s32.totalorder %s19, 1
      %s310 = scalar_select %p309, %s19, 1
      %s311 = smul.addr %s310, 48
      %s312 = smul.addr %s311, 4
      %s313 = scalar_lea.vmem %s3, %s312
      %p314 = pneg %p103
      %p315 = pneg %p100
      %p316 = scmp.lt.s32.totalorder %s19, 1
      %s317 = scalar_select %p316, %s19, 1
      %s318 = smul.addr %s317, 16
      %s319 = smul.addr %s318, 4
      %s320 = scalar_lea.vmem %s4, %s319
      %p321 = pneg %p129
      %p322 = pneg %p126
      %p323 = scmp.lt.s32.totalorder %s19, 1
      %s324 = scalar_select %p323, %s19, 1
      %s325 = smul.addr %s324, 32
      %s326 = smul.addr %s325, 4
      %s327 = scalar_lea.vmem %s5, %s326
      %p328 = pneg %p155
      %p329 = pneg %p152
      %p330 = scmp.lt.s32.totalorder %s19, 1
      %s331 = scalar_select %p330, %s19, 1
      %s332 = smul.addr %s331, 32
      %s333 = smul.addr %s332, 4
      %s334 = scalar_lea.vmem %s6, %s333
      %p335 = pneg %p181
      %p336 = pneg %p178
      %p337 = scmp.lt.s32.totalorder %s19, 1
      %s338 = scalar_select %p337, %s19, 1
      %s339 = smul.addr %s338, 3
      %s340 = smul.addr %s339, 8
      %s341 = scalar_lea.vmem %s7, %s340
      %p342 = pneg %p207
      %p343 = pneg %p204
      %p344 = pneg %p228
      %p345 = pneg %p225
      %p346 = scmp.lt.s32.totalorder %s19, 1
      %s347 = scalar_select %p346, %s19, 1
      %s348 = smul.addr %s347, 48
      %s349 = smul.addr %s348, 4
      %s350 = scalar_lea.vmem %s3, %s349
      %p351 = scmp.lt.s32.totalorder %s19, 1
      %s352 = scalar_select %p351, %s19, 1
      %s353 = smul.addr %s352, 16
      %s354 = smul.addr %s353, 4
      %s355 = scalar_lea.vmem %s4, %s354
      %p356 = scmp.lt.s32.totalorder %s19, 1
      %s357 = scalar_select %p356, %s19, 1
      %s358 = smul.addr %s357, 32
      %s359 = smul.addr %s358, 4
      %s360 = scalar_lea.vmem %s5, %s359
      %p361 = scmp.lt.s32.totalorder %s19, 1
      %s362 = scalar_select %p361, %s19, 1
      %s363 = smul.addr %s362, 32
      %s364 = smul.addr %s363, 4
      %s365 = scalar_lea.vmem %s6, %s364
      %p366 = scmp.lt.s32.totalorder %s19, 1
      %s367 = scalar_select %p366, %s19, 1
      %s368 = smul.addr %s367, 3
      %s369 = smul.addr %s368, 8
      %s370 = scalar_lea.vmem %s7, %s369
      %p371 = scmp.eq.s32.totalorder %s19, 0
      // Predicated region
      $region53: #{bert_for_reranking_forward.1} parent=51 // pred_check
        %p372 = pneg %p371
      $region54: #{bert_for_reranking_forward.1} parent=51 // pred_check_branch
        %374 = sbr.rel (%p372) target = $region56
      $region55: #{bert_for_reranking_forward.1} parent=51 // pred_region
        %v375 = vld [vmem:[%s0] sm:$0xff]
        %v376 = vld [vmem:[%s0 + $0x8] sm:$0xff]
        %v377 = vld [vmem:[%s0 + $0x10] sm:$0xff]
        %v378 = vld [vmem:[%s0 + $0x18] sm:$0xff]
        %v379 = vld [vmem:[%s2] sm:$0x1]
        %v380 = vld [vmem:[%s2 + $0x1] sm:$0x1]
        %381 = vadd.xlane.f32.xlu0 %v375
        %v382 = vpop.xlane.xlu0 %381
        %383 = vadd.xlane.f32.xlu0 %v376
        %v384 = vpop.xlane.xlu0 %383
        %385 = vadd.xlane.f32.xlu0 %v377
        %v386 = vpop.xlane.xlu0 %385
        %387 = vadd.xlane.f32.xlu0 %v378
        %v388 = vpop.xlane.xlu0 %387
        %v389 = vrcp.pop 128.0
        %v390 = vmul.f32 128.0, %v389
        %v391 = vsub.f32 1.0, %v390
        %v392 = vmul.f32 %v389, %v391
        %v393 = vadd.f32 %v389, %v392
        %vm394 = vweird.f32 %v389
        %v395 = vsel %vm394, %v389, %v393
        %v396 = vmul.f32 %v382, %v395
        %v397 = vmul.f32 %v384, %v395
        %v398 = vmul.f32 %v386, %v395
        %v399 = vmul.f32 %v388, %v395
        %v400 = vsub.f32 %v375, %v396
        %v401 = vsub.f32 %v376, %v397
        %v402 = vsub.f32 %v377, %v398
        %v403 = vsub.f32 %v378, %v399
        %v404 = vmul.f32 %v400, %v400
        %v405 = vmul.f32 %v401, %v401
        %v406 = vmul.f32 %v402, %v402
        %v407 = vmul.f32 %v403, %v403
        %408 = vadd.xlane.f32.xlu0 %v404
        %v409 = vpop.xlane.xlu0 %408
        %410 = vadd.xlane.f32.xlu0 %v405
        %v411 = vpop.xlane.xlu0 %410
        %412 = vadd.xlane.f32.xlu0 %v406
        %v413 = vpop.xlane.xlu0 %412
        %414 = vadd.xlane.f32.xlu0 %v407
        %v415 = vpop.xlane.xlu0 %414
        %v416 = vmul.f32 %v409, %v395
        %v417 = vmul.f32 %v411, %v395
        %v418 = vmul.f32 %v413, %v395
        %v419 = vmul.f32 %v415, %v395
        %v420 = vadd.f32 %v416, 1e-12
        %v421 = vadd.f32 %v417, 1e-12
        %v422 = vadd.f32 %v418, 1e-12
        %v423 = vadd.f32 %v419, 1e-12
        %v424 = vrsqrt.pop %v420
        %v425 = vmul.f32 %v424, %v420
        %v426 = vmul.f32 %v425, %v424
        %v427 = vmul.f32 0.5, %v426
        %v428 = vsub.f32 1.5, %v427
        %v429 = vmul.f32 %v424, %v428
        %vm430 = vweird.f32 %v420
        %vm431 = vweird.f32 %v424
        %vm432 = vmor %vm430, %vm431
        %v433 = vsel %vm432, %v424, %v429
        %v434 = vrsqrt.pop %v421
        %v435 = vmul.f32 %v434, %v421
        %v436 = vmul.f32 %v435, %v434
        %v437 = vmul.f32 0.5, %v436
        %v438 = vsub.f32 1.5, %v437
        %v439 = vmul.f32 %v434, %v438
        %vm440 = vweird.f32 %v421
        %vm441 = vweird.f32 %v434
        %vm442 = vmor %vm440, %vm441
        %v443 = vsel %vm442, %v434, %v439
        %v444 = vrsqrt.pop %v422
        %v445 = vmul.f32 %v444, %v422
        %v446 = vmul.f32 %v445, %v444
        %v447 = vmul.f32 0.5, %v446
        %v448 = vsub.f32 1.5, %v447
        %v449 = vmul.f32 %v444, %v448
        %vm450 = vweird.f32 %v422
        %vm451 = vweird.f32 %v444
        %vm452 = vmor %vm450, %vm451
        %v453 = vsel %vm452, %v444, %v449
        %v454 = vrsqrt.pop %v423
        %v455 = vmul.f32 %v454, %v423
        %v456 = vmul.f32 %v455, %v454
        %v457 = vmul.f32 0.5, %v456
        %v458 = vsub.f32 1.5, %v457
        %v459 = vmul.f32 %v454, %v458
        %vm460 = vweird.f32 %v423
        %vm461 = vweird.f32 %v454
        %vm462 = vmor %vm460, %vm461
        %v463 = vsel %vm462, %v454, %v459
        %v464 = vmul.f32 %v400, %v433
        %v465 = vmul.f32 %v401, %v443
        %v466 = vmul.f32 %v402, %v453
        %v467 = vmul.f32 %v403, %v463
        %v468 = vperm.slane %v379, 0
        %v469 = vmul.f32 %v464, %v468
        %v470 = vmul.f32 %v465, %v468
        %v471 = vmul.f32 %v466, %v468
        %v472 = vmul.f32 %v467, %v468
        %v473 = vperm.slane %v380, 0
        %v474 = vadd.f32 %v469, %v473
        %v475 = vadd.f32 %v470, %v473
        %v476 = vadd.f32 %v471, %v473
        %v477 = vadd.f32 %v472, %v473
        %478 = vst [vmem:[%s8] sm:$0xff] %v474
        %479 = vst [vmem:[%s8 + $0x8] sm:$0xff] %v475
        %480 = vst [vmem:[%s8 + $0x10] sm:$0xff] %v476
        %481 = vst [vmem:[%s8 + $0x18] sm:$0xff] %v477
      $region56: #{bert_for_reranking_forward.1} parent=51 // pred_fallthru
        _
      %v482 = vld [vmem:[%s8] sm:$0xff]
      %v483 = vld [vmem:[%s8 + $0x8] sm:$0xff]
      %v484 = vld [vmem:[%s8 + $0x10] sm:$0xff]
      %v485 = vld [vmem:[%s8 + $0x18] sm:$0xff]
      %v486 = vld [vmem:[%s370] sm:$0xff]
      %v487 = vld [vmem:[%s370 + $0x8] sm:$0xff]
      %v488 = vld [vmem:[%s370 + $0x10] sm:$0xff]
      %v489 = vpack.c.bf16 %v483, %v482
      %v490 = vpack.c.bf16 %v485, %v484
      %v491 = vld [vmem:[%s350] sm:$0xff]
      %v492 = vld [vmem:[%s350 + $0x8] sm:$0xf]
      %v493 = vld [vmem:[%s350 + $0xc] sm:$0xff]
      %v494 = vld [vmem:[%s350 + $0x14] sm:$0xf]
      %v495 = vld [vmem:[%s350 + $0x18] sm:$0xff]
      %v496 = vld [vmem:[%s350 + $0x20] sm:$0xf]
      %v497 = vld [vmem:[%s350 + $0x24] sm:$0xff]
      %v498 = vld [vmem:[%s350 + $0x2c] sm:$0xf]
      %v499 = vld [vmem:[%s350 + $0x30] sm:$0xff]
      %v500 = vld [vmem:[%s350 + $0x38] sm:$0xf]
      %v501 = vld [vmem:[%s350 + $0x3c] sm:$0xff]
      %v502 = vld [vmem:[%s350 + $0x44] sm:$0xf]
      %v503 = vld [vmem:[%s350 + $0x48] sm:$0xff]
      %v504 = vld [vmem:[%s350 + $0x50] sm:$0xf]
      %v505 = vld [vmem:[%s350 + $0x54] sm:$0xff]
      %v506 = vld [vmem:[%s350 + $0x5c] sm:$0xf]
      %v507 = vld [vmem:[%s350 + $0x60] sm:$0xff]
      %v508 = vld [vmem:[%s350 + $0x68] sm:$0xf]
      %v509 = vld [vmem:[%s350 + $0x6c] sm:$0xff]
      %v510 = vld [vmem:[%s350 + $0x74] sm:$0xf]
      %v511 = vld [vmem:[%s350 + $0x78] sm:$0xff]
      %v512 = vld [vmem:[%s350 + $0x80] sm:$0xf]
      %v513 = vld [vmem:[%s350 + $0x84] sm:$0xff]
      %v514 = vld [vmem:[%s350 + $0x8c] sm:$0xf]
      %v515 = vld [vmem:[%s350 + $0x90] sm:$0xff]
      %v516 = vld [vmem:[%s350 + $0x98] sm:$0xf]
      %v517 = vld [vmem:[%s350 + $0x9c] sm:$0xff]
      %v518 = vld [vmem:[%s350 + $0xa4] sm:$0xf]
      %v519 = vld [vmem:[%s350 + $0xa8] sm:$0xff]
      %v520 = vld [vmem:[%s350 + $0xb0] sm:$0xf]
      %v521 = vld [vmem:[%s350 + $0xb4] sm:$0xff]
      %v522 = vld [vmem:[%s350 + $0xbc] sm:$0xf]
      %v523 = vperm.slane %v486, 0
      %v524 = vperm.slane %v487, 0
      %v525 = vperm.slane %v488, 0
      %v558 = vunpack.c.l.b16 %v491
      %v559 = vunpack.c.h.b16 %v491
      %v560 = vunpack.c.l.b16 %v492
      %v561 = vunpack.c.l.b16 %v493
      %v562 = vunpack.c.h.b16 %v493
      %v563 = vunpack.c.l.b16 %v494
      %v564 = vunpack.c.l.b16 %v495
      %v565 = vunpack.c.h.b16 %v495
      %v566 = vunpack.c.l.b16 %v496
      %v567 = vunpack.c.l.b16 %v497
      %v568 = vunpack.c.h.b16 %v497
      %v569 = vunpack.c.l.b16 %v498
      %v570 = vunpack.c.l.b16 %v499
      %v571 = vunpack.c.h.b16 %v499
      %v572 = vunpack.c.l.b16 %v500
      %v573 = vunpack.c.l.b16 %v501
      %v574 = vunpack.c.h.b16 %v501
      %v575 = vunpack.c.l.b16 %v502
      %v576 = vunpack.c.l.b16 %v503
      %v577 = vunpack.c.h.b16 %v503
      %v578 = vunpack.c.l.b16 %v504
      %v579 = vunpack.c.l.b16 %v505
      %v580 = vunpack.c.h.b16 %v505
      %v581 = vunpack.c.l.b16 %v506
      %v582 = vunpack.c.l.b16 %v507
      %v583 = vunpack.c.h.b16 %v507
      %v584 = vunpack.c.l.b16 %v508
      %v585 = vunpack.c.l.b16 %v509
      %v586 = vunpack.c.h.b16 %v509
      %v587 = vunpack.c.l.b16 %v510
      %v588 = vunpack.c.l.b16 %v511
      %v589 = vunpack.c.h.b16 %v511
      %v590 = vunpack.c.l.b16 %v512
      %v591 = vunpack.c.l.b16 %v513
      %v592 = vunpack.c.h.b16 %v513
      %v593 = vunpack.c.l.b16 %v514
      %v594 = vunpack.c.l.b16 %v515
      %v595 = vunpack.c.h.b16 %v515
      %v596 = vunpack.c.l.b16 %v516
      %v597 = vunpack.c.l.b16 %v517
      %v598 = vunpack.c.h.b16 %v517
      %v599 = vunpack.c.l.b16 %v518
      %v600 = vunpack.c.l.b16 %v519
      %v601 = vunpack.c.h.b16 %v519
      %v602 = vunpack.c.l.b16 %v520
      %v603 = vunpack.c.l.b16 %v521
      %v604 = vunpack.c.h.b16 %v521
      %v605 = vunpack.c.l.b16 %v522
      %v606 = vpack.c.b16 %v561, %v558
      %v607 = vpack.c.b16 %v562, %v559
      %v608 = vpack.c.b16 %v563, %v560
      %v609 = vpack.c.b16 %v567, %v564
      %v610 = vpack.c.b16 %v568, %v565
      %v611 = vpack.c.b16 %v569, %v566
      %v612 = vpack.c.b16 %v573, %v570
      %v613 = vpack.c.b16 %v574, %v571
      %v614 = vpack.c.b16 %v575, %v572
      %v615 = vpack.c.b16 %v579, %v576
      %v616 = vpack.c.b16 %v580, %v577
      %v617 = vpack.c.b16 %v581, %v578
      %v618 = vpack.c.b16 %v585, %v582
      %v619 = vpack.c.b16 %v586, %v583
      %v620 = vpack.c.b16 %v587, %v584
      %v621 = vpack.c.b16 %v591, %v588
      %v622 = vpack.c.b16 %v592, %v589
      %v623 = vpack.c.b16 %v593, %v590
      %v624 = vpack.c.b16 %v597, %v594
      %v625 = vpack.c.b16 %v598, %v595
      %v626 = vpack.c.b16 %v599, %v596
      %v627 = vpack.c.b16 %v603, %v600
      %v628 = vpack.c.b16 %v604, %v601
      %v629 = vpack.c.b16 %v605, %v602
      %654 = vmatpush.bf16.msra.mxu0 %v627
      %655 = vmatpush.bf16.msra.mxu0 %v624
      %656 = vmatpush.bf16.msra.mxu0 %v621
      %657 = vmatpush.bf16.msra.mxu0 %v618
      %658 = vmatpush.bf16.msra.mxu0 %v615
      %659 = vmatpush.bf16.msra.mxu0 %v612
      %660 = vmatpush.bf16.msra.mxu0 %v609
      %661 = vmatpush.bf16.msra.mxu0 %v606
      %662 = vmatmul.bf16.gmra.mxu0 %v489
      %v663 = vpop.f32.mrf.mxu0
      %v664 = vadd.f32 %v523, %v663
      %v665 = vpop.f32.mrf.mxu0
      %v666 = vadd.f32 %v523, %v665
      %667 = vmatmul.bf16.gmra.mxu0 %v490
      %v668 = vpop.f32.mrf.mxu0
      %v669 = vadd.f32 %v523, %v668
      %v670 = vpop.f32.mrf.mxu0
      %v671 = vadd.f32 %v523, %v670
      %672 = vdwg.mxu0
      %673 = vmatpush.bf16.msra.mxu0 %v628
      %674 = vmatpush.bf16.msra.mxu0 %v625
      %675 = vmatpush.bf16.msra.mxu0 %v622
      %676 = vmatpush.bf16.msra.mxu0 %v619
      %677 = vmatpush.bf16.msra.mxu0 %v616
      %678 = vmatpush.bf16.msra.mxu0 %v613
      %679 = vmatpush.bf16.msra.mxu0 %v610
      %680 = vmatpush.bf16.msra.mxu0 %v607
      %681 = vmatmul.bf16.gmra.mxu0 %v489
      %v682 = vpop.f32.mrf.mxu0
      %v683 = vadd.f32 %v524, %v682
      %v684 = vpop.f32.mrf.mxu0
      %v685 = vadd.f32 %v524, %v684
      %686 = vmatmul.bf16.gmra.mxu0 %v490
      %v687 = vpop.f32.mrf.mxu0
      %v688 = vadd.f32 %v524, %v687
      %v689 = vpop.f32.mrf.mxu0
      %v690 = vadd.f32 %v524, %v689
      %691 = vdwg.mxu0
      %692 = vmatpush.bf16.msra.mxu0 %v629
      %693 = vmatpush.bf16.msra.mxu0 %v626
      %694 = vmatpush.bf16.msra.mxu0 %v623
      %695 = vmatpush.bf16.msra.mxu0 %v620
      %696 = vmatpush.bf16.msra.mxu0 %v617
      %697 = vmatpush.bf16.msra.mxu0 %v614
      %698 = vmatpush.bf16.msra.mxu0 %v611
      %699 = vmatpush.bf16.msra.mxu0 %v608
      %700 = vmatmul.bf16.gmra.mxu0 %v489
      %v701 = vpop.f32.mrf.mxu0
      %v702 = vadd.f32 %v525, %v701
      %v703 = vpop.f32.mrf.mxu0
      %v704 = vadd.f32 %v525, %v703
      %705 = vmatmul.bf16.gmra.mxu0 %v490
      %v706 = vpop.f32.mrf.mxu0
      %v707 = vadd.f32 %v525, %v706
      %v708 = vpop.f32.mrf.mxu0
      %v709 = vadd.f32 %v525, %v708
      %710 = vdwg.mxu0
      %715 = vrot.lane.b32.xlu0 %v664, 96
      %v716 = vpop.permute.xlu0 %715
      %717 = vrot.lane.b32.xlu0 %v666, 96
      %v718 = vpop.permute.xlu0 %717
      %719 = vrot.lane.b32.xlu0 %v669, 96
      %v720 = vpop.permute.xlu0 %719
      %721 = vrot.lane.b32.xlu0 %v671, 96
      %v722 = vpop.permute.xlu0 %721
      %727 = vrot.lane.b32.xlu0 %v664, 64
      %v728 = vpop.permute.xlu0 %727
      %729 = vrot.lane.b32.xlu0 %v666, 64
      %v730 = vpop.permute.xlu0 %729
      %731 = vrot.lane.b32.xlu0 %v669, 64
      %v732 = vpop.permute.xlu0 %731
      %733 = vrot.lane.b32.xlu0 %v671, 64
      %v734 = vpop.permute.xlu0 %733
      %739 = vrot.lane.b32.xlu0 %v664, 32
      %v740 = vpop.permute.xlu0 %739
      %741 = vrot.lane.b32.xlu0 %v666, 32
      %v742 = vpop.permute.xlu0 %741
      %743 = vrot.lane.b32.xlu0 %v669, 32
      %v744 = vpop.permute.xlu0 %743
      %745 = vrot.lane.b32.xlu0 %v671, 32
      %v746 = vpop.permute.xlu0 %745
      %755 = vrot.lane.b32.xlu0 %v683, 96
      %v756 = vpop.permute.xlu0 %755
      %757 = vrot.lane.b32.xlu0 %v685, 96
      %v758 = vpop.permute.xlu0 %757
      %759 = vrot.lane.b32.xlu0 %v688, 96
      %v760 = vpop.permute.xlu0 %759
      %761 = vrot.lane.b32.xlu0 %v690, 96
      %v762 = vpop.permute.xlu0 %761
      %767 = vrot.lane.b32.xlu0 %v683, 64
      %v768 = vpop.permute.xlu0 %767
      %769 = vrot.lane.b32.xlu0 %v685, 64
      %v770 = vpop.permute.xlu0 %769
      %771 = vrot.lane.b32.xlu0 %v688, 64
      %v772 = vpop.permute.xlu0 %771
      %773 = vrot.lane.b32.xlu0 %v690, 64
      %v774 = vpop.permute.xlu0 %773
      %779 = vrot.lane.b32.xlu0 %v683, 32
      %v780 = vpop.permute.xlu0 %779
      %781 = vrot.lane.b32.xlu0 %v685, 32
      %v782 = vpop.permute.xlu0 %781
      %783 = vrot.lane.b32.xlu0 %v688, 32
      %v784 = vpop.permute.xlu0 %783
      %785 = vrot.lane.b32.xlu0 %v690, 32
      %v786 = vpop.permute.xlu0 %785
      %795 = vrot.lane.b32.xlu0 %v702, 96
      %v796 = vpop.permute.xlu0 %795
      %797 = vrot.lane.b32.xlu0 %v704, 96
      %v798 = vpop.permute.xlu0 %797
      %799 = vrot.lane.b32.xlu0 %v707, 96
      %v800 = vpop.permute.xlu0 %799
      %801 = vrot.lane.b32.xlu0 %v709, 96
      %v802 = vpop.permute.xlu0 %801
      %807 = vrot.lane.b32.xlu0 %v702, 64
      %v808 = vpop.permute.xlu0 %807
      %809 = vrot.lane.b32.xlu0 %v704, 64
      %v810 = vpop.permute.xlu0 %809
      %811 = vrot.lane.b32.xlu0 %v707, 64
      %v812 = vpop.permute.xlu0 %811
      %813 = vrot.lane.b32.xlu0 %v709, 64
      %v814 = vpop.permute.xlu0 %813
      %819 = vrot.lane.b32.xlu0 %v702, 32
      %v820 = vpop.permute.xlu0 %819
      %821 = vrot.lane.b32.xlu0 %v704, 32
      %v822 = vpop.permute.xlu0 %821
      %823 = vrot.lane.b32.xlu0 %v707, 32
      %v824 = vpop.permute.xlu0 %823
      %825 = vrot.lane.b32.xlu0 %v709, 32
      %v826 = vpop.permute.xlu0 %825
      %v831 = vpack.c.bf16 %v666, %v664
      %v832 = vpack.c.bf16 %v671, %v669
      %v833 = vpack.c.bf16 %v718, %v716
      %v834 = vpack.c.bf16 %v722, %v720
      %v835 = vpack.c.bf16 %v730, %v728
      %v836 = vpack.c.bf16 %v734, %v732
      %v837 = vpack.c.bf16 %v742, %v740
      %v838 = vpack.c.bf16 %v746, %v744
      %v839 = vpack.c.bf16 %v685, %v683
      %v840 = vpack.c.bf16 %v690, %v688
      %v841 = vpack.c.bf16 %v758, %v756
      %v842 = vpack.c.bf16 %v762, %v760
      %v843 = vpack.c.bf16 %v770, %v768
      %v844 = vpack.c.bf16 %v774, %v772
      %v845 = vpack.c.bf16 %v782, %v780
      %v846 = vpack.c.bf16 %v786, %v784
      %vm847 = vcmask 261120
      %v849 = vsel %vm847, %v831, 0
      %v852 = vsel %vm847, %v832, 0
      %v855 = vsel %vm847, %v833, 0
      %v858 = vsel %vm847, %v834, 0
      %v861 = vsel %vm847, %v835, 0
      %v864 = vsel %vm847, %v836, 0
      %v867 = vsel %vm847, %v837, 0
      %v870 = vsel %vm847, %v838, 0
      %v873 = vsel %vm847, %v839, 0
      %v876 = vsel %vm847, %v840, 0
      %v879 = vsel %vm847, %v841, 0
      %v882 = vsel %vm847, %v842, 0
      %v885 = vsel %vm847, %v843, 0
      %v888 = vsel %vm847, %v844, 0
      %v891 = vsel %vm847, %v845, 0
      %v894 = vsel %vm847, %v846, 0
      %896 = vmatpush.bf16.xpose.msra.mxu0 %v894
      %897 = vmatpush.bf16.xpose.msra.mxu0 %v891
      %898 = vmatpush.bf16.xpose.msra.mxu0 %v888
      %899 = vmatpush.bf16.xpose.msra.mxu0 %v885
      %900 = vmatpush.bf16.xpose.msra.mxu0 %v882
      %901 = vmatpush.bf16.xpose.msra.mxu0 %v879
      %902 = vmatpush.bf16.xpose.msra.mxu0 %v876
      %903 = vmatpush.bf16.xpose.msra.mxu0 %v873
      %904 = vmatmul.bf16.gmra.mxu0 %v849
      %v905 = vpop.f32.mrf.mxu0
      %v906 = vadd.f32 0.0, %v905
      %v907 = vpop.f32.mrf.mxu0
      %v908 = vadd.f32 0.0, %v907
      %909 = vmatmul.bf16.gmra.mxu0 %v852
      %v910 = vpop.f32.mrf.mxu0
      %v911 = vadd.f32 0.0, %v910
      %v912 = vpop.f32.mrf.mxu0
      %v913 = vadd.f32 0.0, %v912
      %914 = vmatmul.bf16.gmra.mxu0 %v855
      %v915 = vpop.f32.mrf.mxu0
      %v916 = vadd.f32 0.0, %v915
      %v917 = vpop.f32.mrf.mxu0
      %v918 = vadd.f32 0.0, %v917
      %919 = vmatmul.bf16.gmra.mxu0 %v858
      %v920 = vpop.f32.mrf.mxu0
      %v921 = vadd.f32 0.0, %v920
      %v922 = vpop.f32.mrf.mxu0
      %v923 = vadd.f32 0.0, %v922
      %924 = vmatmul.bf16.gmra.mxu0 %v861
      %v925 = vpop.f32.mrf.mxu0
      %v926 = vadd.f32 0.0, %v925
      %v927 = vpop.f32.mrf.mxu0
      %v928 = vadd.f32 0.0, %v927
      %929 = vmatmul.bf16.gmra.mxu0 %v864
      %v930 = vpop.f32.mrf.mxu0
      %v931 = vadd.f32 0.0, %v930
      %v932 = vpop.f32.mrf.mxu0
      %v933 = vadd.f32 0.0, %v932
      %934 = vmatmul.bf16.gmra.mxu0 %v867
      %v935 = vpop.f32.mrf.mxu0
      %v936 = vadd.f32 0.0, %v935
      %v937 = vpop.f32.mrf.mxu0
      %v938 = vadd.f32 0.0, %v937
      %939 = vmatmul.bf16.gmra.mxu0 %v870
      %v940 = vpop.f32.mrf.mxu0
      %v941 = vadd.f32 0.0, %v940
      %v942 = vpop.f32.mrf.mxu0
      %v943 = vadd.f32 0.0, %v942
      %944 = vdwg.mxu0
      %v945 = vmul.f32 %v906, 0.17677669
      %v946 = vmul.f32 %v908, 0.17677669
      %v947 = vmul.f32 %v911, 0.17677669
      %v948 = vmul.f32 %v913, 0.17677669
      %v949 = vmul.f32 %v916, 0.17677669
      %v950 = vmul.f32 %v918, 0.17677669
      %v951 = vmul.f32 %v921, 0.17677669
      %v952 = vmul.f32 %v923, 0.17677669
      %v953 = vmul.f32 %v926, 0.17677669
      %v954 = vmul.f32 %v928, 0.17677669
      %v955 = vmul.f32 %v931, 0.17677669
      %v956 = vmul.f32 %v933, 0.17677669
      %v957 = vmul.f32 %v936, 0.17677669
      %v958 = vmul.f32 %v938, 0.17677669
      %v959 = vmul.f32 %v941, 0.17677669
      %v960 = vmul.f32 %v943, 0.17677669
      %v961 = vld [vmem:[%s1] sm:$0xff]
      %v962 = vld [vmem:[%s1 + $0x8] sm:$0xff]
      %v963 = vld [vmem:[%s1 + $0x10] sm:$0xff]
      %v964 = vld [vmem:[%s1 + $0x18] sm:$0xff]
      %v965 = vld [vmem:[%s1 + $0x20] sm:$0xff]
      %v966 = vld [vmem:[%s1 + $0x28] sm:$0xff]
      %v967 = vld [vmem:[%s1 + $0x30] sm:$0xff]
      %v968 = vld [vmem:[%s1 + $0x38] sm:$0xff]
      %v969 = vld [vmem:[%s1 + $0x40] sm:$0xff]
      %v970 = vld [vmem:[%s1 + $0x48] sm:$0xff]
      %v971 = vld [vmem:[%s1 + $0x50] sm:$0xff]
      %v972 = vld [vmem:[%s1 + $0x58] sm:$0xff]
      %v973 = vld [vmem:[%s1 + $0x60] sm:$0xff]
      %v974 = vld [vmem:[%s1 + $0x68] sm:$0xff]
      %v975 = vld [vmem:[%s1 + $0x70] sm:$0xff]
      %v976 = vld [vmem:[%s1 + $0x78] sm:$0xff]
      %v977 = vadd.f32 %v945, %v961
      %v978 = vadd.f32 %v946, %v962
      %v979 = vadd.f32 %v947, %v963
      %v980 = vadd.f32 %v948, %v964
      %v981 = vadd.f32 %v949, %v965
      %v982 = vadd.f32 %v950, %v966
      %v983 = vadd.f32 %v951, %v967
      %v984 = vadd.f32 %v952, %v968
      %v985 = vadd.f32 %v953, %v969
      %v986 = vadd.f32 %v954, %v970
      %v987 = vadd.f32 %v955, %v971
      %v988 = vadd.f32 %v956, %v972
      %v989 = vadd.f32 %v957, %v973
      %v990 = vadd.f32 %v958, %v974
      %v991 = vadd.f32 %v959, %v975
      %v992 = vadd.f32 %v960, %v976
      %993 = vmax.xlane.f32.xlu0 %v977
      %v994 = vpop.xlane.xlu0 %993
      %995 = vmax.xlane.f32.xlu0 %v978
      %v996 = vpop.xlane.xlu0 %995
      %997 = vmax.xlane.f32.xlu0 %v979
      %v998 = vpop.xlane.xlu0 %997
      %999 = vmax.xlane.f32.xlu0 %v980
      %v1000 = vpop.xlane.xlu0 %999
      %1001 = vmax.xlane.f32.xlu0 %v981
      %v1002 = vpop.xlane.xlu0 %1001
      %1003 = vmax.xlane.f32.xlu0 %v982
      %v1004 = vpop.xlane.xlu0 %1003
      %1005 = vmax.xlane.f32.xlu0 %v983
      %v1006 = vpop.xlane.xlu0 %1005
      %1007 = vmax.xlane.f32.xlu0 %v984
      %v1008 = vpop.xlane.xlu0 %1007
      %1009 = vmax.xlane.f32.xlu0 %v985
      %v1010 = vpop.xlane.xlu0 %1009
      %1011 = vmax.xlane.f32.xlu0 %v986
      %v1012 = vpop.xlane.xlu0 %1011
      %1013 = vmax.xlane.f32.xlu0 %v987
      %v1014 = vpop.xlane.xlu0 %1013
      %1015 = vmax.xlane.f32.xlu0 %v988
      %v1016 = vpop.xlane.xlu0 %1015
      %1017 = vmax.xlane.f32.xlu0 %v989
      %v1018 = vpop.xlane.xlu0 %1017
      %1019 = vmax.xlane.f32.xlu0 %v990
      %v1020 = vpop.xlane.xlu0 %1019
      %1021 = vmax.xlane.f32.xlu0 %v991
      %v1022 = vpop.xlane.xlu0 %1021
      %1023 = vmax.xlane.f32.xlu0 %v992
      %v1024 = vpop.xlane.xlu0 %1023
      %v1025 = vsub.f32 %v977, %v994
      %v1026 = vsub.f32 %v978, %v996
      %v1027 = vsub.f32 %v979, %v998
      %v1028 = vsub.f32 %v980, %v1000
      %v1029 = vsub.f32 %v981, %v1002
      %v1030 = vsub.f32 %v982, %v1004
      %v1031 = vsub.f32 %v983, %v1006
      %v1032 = vsub.f32 %v984, %v1008
      %v1033 = vsub.f32 %v985, %v1010
      %v1034 = vsub.f32 %v986, %v1012
      %v1035 = vsub.f32 %v987, %v1014
      %v1036 = vsub.f32 %v988, %v1016
      %v1037 = vsub.f32 %v989, %v1018
      %v1038 = vsub.f32 %v990, %v1020
      %v1039 = vsub.f32 %v991, %v1022
      %v1040 = vsub.f32 %v992, %v1024
      %v1041 = vmul.f32 %v1025, 1.442695
      %v1042 = vpow.pop %v1041
      %v1043 = vmul.f32 %v1026, 1.442695
      %v1044 = vpow.pop %v1043
      %v1045 = vmul.f32 %v1027, 1.442695
      %v1046 = vpow.pop %v1045
      %v1047 = vmul.f32 %v1028, 1.442695
      %v1048 = vpow.pop %v1047
      %v1049 = vmul.f32 %v1029, 1.442695
      %v1050 = vpow.pop %v1049
      %v1051 = vmul.f32 %v1030, 1.442695
      %v1052 = vpow.pop %v1051
      %v1053 = vmul.f32 %v1031, 1.442695
      %v1054 = vpow.pop %v1053
      %v1055 = vmul.f32 %v1032, 1.442695
      %v1056 = vpow.pop %v1055
      %v1057 = vmul.f32 %v1033, 1.442695
      %v1058 = vpow.pop %v1057
      %v1059 = vmul.f32 %v1034, 1.442695
      %v1060 = vpow.pop %v1059
      %v1061 = vmul.f32 %v1035, 1.442695
      %v1062 = vpow.pop %v1061
      %v1063 = vmul.f32 %v1036, 1.442695
      %v1064 = vpow.pop %v1063
      %v1065 = vmul.f32 %v1037, 1.442695
      %v1066 = vpow.pop %v1065
      %v1067 = vmul.f32 %v1038, 1.442695
      %v1068 = vpow.pop %v1067
      %v1069 = vmul.f32 %v1039, 1.442695
      %v1070 = vpow.pop %v1069
      %v1071 = vmul.f32 %v1040, 1.442695
      %v1072 = vpow.pop %v1071
      %1073 = vadd.xlane.f32.xlu0 %v1042
      %v1074 = vpop.xlane.xlu0 %1073
      %1075 = vadd.xlane.f32.xlu0 %v1044
      %v1076 = vpop.xlane.xlu0 %1075
      %1077 = vadd.xlane.f32.xlu0 %v1046
      %v1078 = vpop.xlane.xlu0 %1077
      %1079 = vadd.xlane.f32.xlu0 %v1048
      %v1080 = vpop.xlane.xlu0 %1079
      %1081 = vadd.xlane.f32.xlu0 %v1050
      %v1082 = vpop.xlane.xlu0 %1081
      %1083 = vadd.xlane.f32.xlu0 %v1052
      %v1084 = vpop.xlane.xlu0 %1083
      %1085 = vadd.xlane.f32.xlu0 %v1054
      %v1086 = vpop.xlane.xlu0 %1085
      %1087 = vadd.xlane.f32.xlu0 %v1056
      %v1088 = vpop.xlane.xlu0 %1087
      %1089 = vadd.xlane.f32.xlu0 %v1058
      %v1090 = vpop.xlane.xlu0 %1089
      %1091 = vadd.xlane.f32.xlu0 %v1060
      %v1092 = vpop.xlane.xlu0 %1091
      %1093 = vadd.xlane.f32.xlu0 %v1062
      %v1094 = vpop.xlane.xlu0 %1093
      %1095 = vadd.xlane.f32.xlu0 %v1064
      %v1096 = vpop.xlane.xlu0 %1095
      %1097 = vadd.xlane.f32.xlu0 %v1066
      %v1098 = vpop.xlane.xlu0 %1097
      %1099 = vadd.xlane.f32.xlu0 %v1068
      %v1100 = vpop.xlane.xlu0 %1099
      %1101 = vadd.xlane.f32.xlu0 %v1070
      %v1102 = vpop.xlane.xlu0 %1101
      %1103 = vadd.xlane.f32.xlu0 %v1072
      %v1104 = vpop.xlane.xlu0 %1103
      %v1105 = vrcp.pop %v1074
      %v1106 = vrcp.pop %v1076
      %v1107 = vrcp.pop %v1078
      %v1108 = vrcp.pop %v1080
      %v1109 = vrcp.pop %v1082
      %v1110 = vrcp.pop %v1084
      %v1111 = vrcp.pop %v1086
      %v1112 = vrcp.pop %v1088
      %v1113 = vrcp.pop %v1090
      %v1114 = vrcp.pop %v1092
      %v1115 = vrcp.pop %v1094
      %v1116 = vrcp.pop %v1096
      %v1117 = vrcp.pop %v1098
      %v1118 = vrcp.pop %v1100
      %v1119 = vrcp.pop %v1102
      %v1120 = vrcp.pop %v1104
      %v1121 = vmul.f32 %v1042, %v1105
      %v1122 = vmul.f32 %v1044, %v1106
      %v1123 = vmul.f32 %v1046, %v1107
      %v1124 = vmul.f32 %v1048, %v1108
      %v1125 = vmul.f32 %v1050, %v1109
      %v1126 = vmul.f32 %v1052, %v1110
      %v1127 = vmul.f32 %v1054, %v1111
      %v1128 = vmul.f32 %v1056, %v1112
      %v1129 = vmul.f32 %v1058, %v1113
      %v1130 = vmul.f32 %v1060, %v1114
      %v1131 = vmul.f32 %v1062, %v1115
      %v1132 = vmul.f32 %v1064, %v1116
      %v1133 = vmul.f32 %v1066, %v1117
      %v1134 = vmul.f32 %v1068, %v1118
      %v1135 = vmul.f32 %v1070, %v1119
      %v1136 = vmul.f32 %v1072, %v1120
      %v1137 = vpack.c.bf16 %v1122, %v1121
      %v1138 = vpack.c.bf16 %v1124, %v1123
      %v1139 = vpack.c.bf16 %v1126, %v1125
      %v1140 = vpack.c.bf16 %v1128, %v1127
      %v1141 = vpack.c.bf16 %v1130, %v1129
      %v1142 = vpack.c.bf16 %v1132, %v1131
      %v1143 = vpack.c.bf16 %v1134, %v1133
      %v1144 = vpack.c.bf16 %v1136, %v1135
      %v1145 = vpack.c.bf16 %v704, %v702
      %v1146 = vpack.c.bf16 %v709, %v707
      %v1147 = vpack.c.bf16 %v798, %v796
      %v1148 = vpack.c.bf16 %v802, %v800
      %v1149 = vpack.c.bf16 %v810, %v808
      %v1150 = vpack.c.bf16 %v814, %v812
      %v1151 = vpack.c.bf16 %v822, %v820
      %v1152 = vpack.c.bf16 %v826, %v824
      %1153 = vmatpush.bf16.msra.mxu0 %v1152
      %1154 = vmatpush.bf16.msra.mxu0 %v1151
      %1155 = vmatpush.bf16.msra.mxu0 %v1150
      %1156 = vmatpush.bf16.msra.mxu0 %v1149
      %1157 = vmatpush.bf16.msra.mxu0 %v1148
      %1158 = vmatpush.bf16.msra.mxu0 %v1147
      %1159 = vmatpush.bf16.msra.mxu0 %v1146
      %1160 = vmatpush.bf16.msra.mxu0 %v1145
      %1161 = vmatmul.bf16.gmra.mxu0 %v1137
      %v1162 = vpop.f32.mrf.mxu0
      %v1163 = vadd.f32 0.0, %v1162
      %v1164 = vpop.f32.mrf.mxu0
      %v1165 = vadd.f32 0.0, %v1164
      %1166 = vmatmul.bf16.gmra.mxu0 %v1138
      %v1167 = vpop.f32.mrf.mxu0
      %v1168 = vadd.f32 0.0, %v1167
      %v1169 = vpop.f32.mrf.mxu0
      %v1170 = vadd.f32 0.0, %v1169
      %1171 = vmatmul.bf16.gmra.mxu0 %v1139
      %v1172 = vpop.f32.mrf.mxu0
      %v1173 = vadd.f32 0.0, %v1172
      %v1174 = vpop.f32.mrf.mxu0
      %v1175 = vadd.f32 0.0, %v1174
      %1176 = vmatmul.bf16.gmra.mxu0 %v1140
      %v1177 = vpop.f32.mrf.mxu0
      %v1178 = vadd.f32 0.0, %v1177
      %v1179 = vpop.f32.mrf.mxu0
      %v1180 = vadd.f32 0.0, %v1179
      %1181 = vmatmul.bf16.gmra.mxu0 %v1141
      %v1182 = vpop.f32.mrf.mxu0
      %v1183 = vadd.f32 0.0, %v1182
      %v1184 = vpop.f32.mrf.mxu0
      %v1185 = vadd.f32 0.0, %v1184
      %1186 = vmatmul.bf16.gmra.mxu0 %v1142
      %v1187 = vpop.f32.mrf.mxu0
      %v1188 = vadd.f32 0.0, %v1187
      %v1189 = vpop.f32.mrf.mxu0
      %v1190 = vadd.f32 0.0, %v1189
      %1191 = vmatmul.bf16.gmra.mxu0 %v1143
      %v1192 = vpop.f32.mrf.mxu0
      %v1193 = vadd.f32 0.0, %v1192
      %v1194 = vpop.f32.mrf.mxu0
      %v1195 = vadd.f32 0.0, %v1194
      %1196 = vmatmul.bf16.gmra.mxu0 %v1144
      %v1197 = vpop.f32.mrf.mxu0
      %v1198 = vadd.f32 0.0, %v1197
      %v1199 = vpop.f32.mrf.mxu0
      %v1200 = vadd.f32 0.0, %v1199
      %1201 = vdwg.mxu0
      %1206 = vrot.lane.b32.xlu0 %v1173, 32
      %v1207 = vpop.permute.xlu0 %1206
      %1208 = vrot.lane.b32.xlu0 %v1175, 32
      %v1209 = vpop.permute.xlu0 %1208
      %1210 = vrot.lane.b32.xlu0 %v1178, 32
      %v1211 = vpop.permute.xlu0 %1210
      %1212 = vrot.lane.b32.xlu0 %v1180, 32
      %v1213 = vpop.permute.xlu0 %1212
      %1222 = vrot.lane.b32.xlu0 %v1183, 64
      %v1223 = vpop.permute.xlu0 %1222
      %1224 = vrot.lane.b32.xlu0 %v1185, 64
      %v1225 = vpop.permute.xlu0 %1224
      %1226 = vrot.lane.b32.xlu0 %v1188, 64
      %v1227 = vpop.permute.xlu0 %1226
      %1228 = vrot.lane.b32.xlu0 %v1190, 64
      %v1229 = vpop.permute.xlu0 %1228
      %1238 = vrot.lane.b32.xlu0 %v1193, 96
      %v1239 = vpop.permute.xlu0 %1238
      %1240 = vrot.lane.b32.xlu0 %v1195, 96
      %v1241 = vpop.permute.xlu0 %1240
      %1242 = vrot.lane.b32.xlu0 %v1198, 96
      %v1243 = vpop.permute.xlu0 %1242
      %1244 = vrot.lane.b32.xlu0 %v1200, 96
      %v1245 = vpop.permute.xlu0 %1244
      %v1250 = vsel %vm847, %v1163, %v1207
      %v1251 = vsel %vm847, %v1165, %v1209
      %v1252 = vsel %vm847, %v1168, %v1211
      %v1253 = vsel %vm847, %v1170, %v1213
      %vm1254 = vcmask 523264
      %v1255 = vsel %vm1254, %v1250, %v1223
      %v1256 = vsel %vm1254, %v1251, %v1225
      %v1257 = vsel %vm1254, %v1252, %v1227
      %v1258 = vsel %vm1254, %v1253, %v1229
      %vm1259 = vcmask 785408
      %v1260 = vsel %vm1259, %v1255, %v1239
      %v1261 = vsel %vm1259, %v1256, %v1241
      %v1262 = vsel %vm1259, %v1257, %v1243
      %v1263 = vsel %vm1259, %v1258, %v1245
      %v1264 = vpack.c.bf16 %v1261, %v1260
      %v1265 = vpack.c.bf16 %v1263, %v1262
      %v1266 = vld [vmem:[%s355] sm:$0xf]
      %v1267 = vld [vmem:[%s355 + $0x4] sm:$0xf]
      %v1268 = vld [vmem:[%s355 + $0x8] sm:$0xf]
      %v1269 = vld [vmem:[%s355 + $0xc] sm:$0xf]
      %v1270 = vld [vmem:[%s355 + $0x10] sm:$0xf]
      %v1271 = vld [vmem:[%s355 + $0x14] sm:$0xf]
      %v1272 = vld [vmem:[%s355 + $0x18] sm:$0xf]
      %v1273 = vld [vmem:[%s355 + $0x1c] sm:$0xf]
      %v1274 = vld [vmem:[%s355 + $0x20] sm:$0xf]
      %v1275 = vld [vmem:[%s355 + $0x24] sm:$0xf]
      %v1276 = vld [vmem:[%s355 + $0x28] sm:$0xf]
      %v1277 = vld [vmem:[%s355 + $0x2c] sm:$0xf]
      %v1278 = vld [vmem:[%s355 + $0x30] sm:$0xf]
      %v1279 = vld [vmem:[%s355 + $0x34] sm:$0xf]
      %v1280 = vld [vmem:[%s355 + $0x38] sm:$0xf]
      %v1281 = vld [vmem:[%s355 + $0x3c] sm:$0xf]
      %v1282 = vperm.slane %v486, 2
      %v1299 = vunpack.c.l.b16 %v1266
      %v1300 = vunpack.c.l.b16 %v1267
      %v1301 = vunpack.c.l.b16 %v1268
      %v1302 = vunpack.c.l.b16 %v1269
      %v1303 = vunpack.c.l.b16 %v1270
      %v1304 = vunpack.c.l.b16 %v1271
      %v1305 = vunpack.c.l.b16 %v1272
      %v1306 = vunpack.c.l.b16 %v1273
      %v1307 = vunpack.c.l.b16 %v1274
      %v1308 = vunpack.c.l.b16 %v1275
      %v1309 = vunpack.c.l.b16 %v1276
      %v1310 = vunpack.c.l.b16 %v1277
      %v1311 = vunpack.c.l.b16 %v1278
      %v1312 = vunpack.c.l.b16 %v1279
      %v1313 = vunpack.c.l.b16 %v1280
      %v1314 = vunpack.c.l.b16 %v1281
      %v1315 = vpack.c.b16 %v1300, %v1299
      %v1316 = vpack.c.b16 %v1302, %v1301
      %v1317 = vpack.c.b16 %v1304, %v1303
      %v1318 = vpack.c.b16 %v1306, %v1305
      %v1319 = vpack.c.b16 %v1308, %v1307
      %v1320 = vpack.c.b16 %v1310, %v1309
      %v1321 = vpack.c.b16 %v1312, %v1311
      %v1322 = vpack.c.b16 %v1314, %v1313
      %1331 = vmatpush.bf16.msra.mxu0 %v1322
      %1332 = vmatpush.bf16.msra.mxu0 %v1321
      %1333 = vmatpush.bf16.msra.mxu0 %v1320
      %1334 = vmatpush.bf16.msra.mxu0 %v1319
      %1335 = vmatpush.bf16.msra.mxu0 %v1318
      %1336 = vmatpush.bf16.msra.mxu0 %v1317
      %1337 = vmatpush.bf16.msra.mxu0 %v1316
      %1338 = vmatpush.bf16.msra.mxu0 %v1315
      %1339 = vmatmul.bf16.gmra.mxu0 %v1264
      %v1340 = vpop.f32.mrf.mxu0
      %v1341 = vadd.f32 %v1282, %v1340
      %v1342 = vpop.f32.mrf.mxu0
      %v1343 = vadd.f32 %v1282, %v1342
      %1344 = vmatmul.bf16.gmra.mxu0 %v1265
      %v1345 = vpop.f32.mrf.mxu0
      %v1346 = vadd.f32 %v1282, %v1345
      %v1347 = vpop.f32.mrf.mxu0
      %v1348 = vadd.f32 %v1282, %v1347
      %1349 = vdwg.mxu0
      %v1350 = vadd.f32 %v1341, %v482
      %v1351 = vadd.f32 %v1343, %v483
      %v1352 = vadd.f32 %v1346, %v484
      %v1353 = vadd.f32 %v1348, %v485
      %1354 = vadd.xlane.f32.xlu0 %v1350
      %v1355 = vpop.xlane.xlu0 %1354
      %1356 = vadd.xlane.f32.xlu0 %v1351
      %v1357 = vpop.xlane.xlu0 %1356
      %1358 = vadd.xlane.f32.xlu0 %v1352
      %v1359 = vpop.xlane.xlu0 %1358
      %1360 = vadd.xlane.f32.xlu0 %v1353
      %v1361 = vpop.xlane.xlu0 %1360
      %v1362 = vrcp.pop 128.0
      %v1363 = vmul.f32 128.0, %v1362
      %v1364 = vsub.f32 1.0, %v1363
      %v1365 = vmul.f32 %v1362, %v1364
      %v1366 = vadd.f32 %v1362, %v1365
      %vm1367 = vweird.f32 %v1362
      %v1368 = vsel %vm1367, %v1362, %v1366
      %v1369 = vmul.f32 %v1355, %v1368
      %v1370 = vmul.f32 %v1357, %v1368
      %v1371 = vmul.f32 %v1359, %v1368
      %v1372 = vmul.f32 %v1361, %v1368
      %v1373 = vsub.f32 %v1350, %v1369
      %v1374 = vsub.f32 %v1351, %v1370
      %v1375 = vsub.f32 %v1352, %v1371
      %v1376 = vsub.f32 %v1353, %v1372
      %v1377 = vmul.f32 %v1373, %v1373
      %v1378 = vmul.f32 %v1374, %v1374
      %v1379 = vmul.f32 %v1375, %v1375
      %v1380 = vmul.f32 %v1376, %v1376
      %1381 = vadd.xlane.f32.xlu0 %v1377
      %v1382 = vpop.xlane.xlu0 %1381
      %1383 = vadd.xlane.f32.xlu0 %v1378
      %v1384 = vpop.xlane.xlu0 %1383
      %1385 = vadd.xlane.f32.xlu0 %v1379
      %v1386 = vpop.xlane.xlu0 %1385
      %1387 = vadd.xlane.f32.xlu0 %v1380
      %v1388 = vpop.xlane.xlu0 %1387
      %v1389 = vmul.f32 %v1382, %v1368
      %v1390 = vmul.f32 %v1384, %v1368
      %v1391 = vmul.f32 %v1386, %v1368
      %v1392 = vmul.f32 %v1388, %v1368
      %v1393 = vadd.f32 %v1389, 1e-12
      %v1394 = vadd.f32 %v1390, 1e-12
      %v1395 = vadd.f32 %v1391, 1e-12
      %v1396 = vadd.f32 %v1392, 1e-12
      %v1397 = vrsqrt.pop %v1393
      %v1398 = vmul.f32 %v1397, %v1393
      %v1399 = vmul.f32 %v1398, %v1397
      %v1400 = vmul.f32 0.5, %v1399
      %v1401 = vsub.f32 1.5, %v1400
      %v1402 = vmul.f32 %v1397, %v1401
      %vm1403 = vweird.f32 %v1393
      %vm1404 = vweird.f32 %v1397
      %vm1405 = vmor %vm1403, %vm1404
      %v1406 = vsel %vm1405, %v1397, %v1402
      %v1407 = vrsqrt.pop %v1394
      %v1408 = vmul.f32 %v1407, %v1394
      %v1409 = vmul.f32 %v1408, %v1407
      %v1410 = vmul.f32 0.5, %v1409
      %v1411 = vsub.f32 1.5, %v1410
      %v1412 = vmul.f32 %v1407, %v1411
      %vm1413 = vweird.f32 %v1394
      %vm1414 = vweird.f32 %v1407
      %vm1415 = vmor %vm1413, %vm1414
      %v1416 = vsel %vm1415, %v1407, %v1412
      %v1417 = vrsqrt.pop %v1395
      %v1418 = vmul.f32 %v1417, %v1395
      %v1419 = vmul.f32 %v1418, %v1417
      %v1420 = vmul.f32 0.5, %v1419
      %v1421 = vsub.f32 1.5, %v1420
      %v1422 = vmul.f32 %v1417, %v1421
      %vm1423 = vweird.f32 %v1395
      %vm1424 = vweird.f32 %v1417
      %vm1425 = vmor %vm1423, %vm1424
      %v1426 = vsel %vm1425, %v1417, %v1422
      %v1427 = vrsqrt.pop %v1396
      %v1428 = vmul.f32 %v1427, %v1396
      %v1429 = vmul.f32 %v1428, %v1427
      %v1430 = vmul.f32 0.5, %v1429
      %v1431 = vsub.f32 1.5, %v1430
      %v1432 = vmul.f32 %v1427, %v1431
      %vm1433 = vweird.f32 %v1396
      %vm1434 = vweird.f32 %v1427
      %vm1435 = vmor %vm1433, %vm1434
      %v1436 = vsel %vm1435, %v1427, %v1432
      %v1437 = vmul.f32 %v1373, %v1406
      %v1438 = vmul.f32 %v1374, %v1416
      %v1439 = vmul.f32 %v1375, %v1426
      %v1440 = vmul.f32 %v1376, %v1436
      %v1441 = vperm.slane %v486, 3
      %v1442 = vmul.f32 %v1437, %v1441
      %v1443 = vmul.f32 %v1438, %v1441
      %v1444 = vmul.f32 %v1439, %v1441
      %v1445 = vmul.f32 %v1440, %v1441
      %v1446 = vperm.slane %v486, 4
      %v1447 = vadd.f32 %v1442, %v1446
      %v1448 = vadd.f32 %v1443, %v1446
      %v1449 = vadd.f32 %v1444, %v1446
      %v1450 = vadd.f32 %v1445, %v1446
      %v1451 = vpack.c.bf16 %v1448, %v1447
      %v1452 = vpack.c.bf16 %v1450, %v1449
      %v1453 = vld [vmem:[%s360] sm:$0xff]
      %v1454 = vld [vmem:[%s360 + $0x8] sm:$0xff]
      %v1455 = vld [vmem:[%s360 + $0x10] sm:$0xff]
      %v1456 = vld [vmem:[%s360 + $0x18] sm:$0xff]
      %v1457 = vld [vmem:[%s360 + $0x20] sm:$0xff]
      %v1458 = vld [vmem:[%s360 + $0x28] sm:$0xff]
      %v1459 = vld [vmem:[%s360 + $0x30] sm:$0xff]
      %v1460 = vld [vmem:[%s360 + $0x38] sm:$0xff]
      %v1461 = vld [vmem:[%s360 + $0x40] sm:$0xff]
      %v1462 = vld [vmem:[%s360 + $0x48] sm:$0xff]
      %v1463 = vld [vmem:[%s360 + $0x50] sm:$0xff]
      %v1464 = vld [vmem:[%s360 + $0x58] sm:$0xff]
      %v1465 = vld [vmem:[%s360 + $0x60] sm:$0xff]
      %v1466 = vld [vmem:[%s360 + $0x68] sm:$0xff]
      %v1467 = vld [vmem:[%s360 + $0x70] sm:$0xff]
      %v1468 = vld [vmem:[%s360 + $0x78] sm:$0xff]
      %v1469 = vperm.slane %v486, 1
      %v1470 = vperm.slane %v487, 1
      %v1487 = vunpack.c.l.b16 %v1453
      %v1488 = vunpack.c.h.b16 %v1453
      %v1489 = vunpack.c.l.b16 %v1454
      %v1490 = vunpack.c.h.b16 %v1454
      %v1491 = vunpack.c.l.b16 %v1455
      %v1492 = vunpack.c.h.b16 %v1455
      %v1493 = vunpack.c.l.b16 %v1456
      %v1494 = vunpack.c.h.b16 %v1456
      %v1495 = vunpack.c.l.b16 %v1457
      %v1496 = vunpack.c.h.b16 %v1457
      %v1497 = vunpack.c.l.b16 %v1458
      %v1498 = vunpack.c.h.b16 %v1458
      %v1499 = vunpack.c.l.b16 %v1459
      %v1500 = vunpack.c.h.b16 %v1459
      %v1501 = vunpack.c.l.b16 %v1460
      %v1502 = vunpack.c.h.b16 %v1460
      %v1503 = vunpack.c.l.b16 %v1461
      %v1504 = vunpack.c.h.b16 %v1461
      %v1505 = vunpack.c.l.b16 %v1462
      %v1506 = vunpack.c.h.b16 %v1462
      %v1507 = vunpack.c.l.b16 %v1463
      %v1508 = vunpack.c.h.b16 %v1463
      %v1509 = vunpack.c.l.b16 %v1464
      %v1510 = vunpack.c.h.b16 %v1464
      %v1511 = vunpack.c.l.b16 %v1465
      %v1512 = vunpack.c.h.b16 %v1465
      %v1513 = vunpack.c.l.b16 %v1466
      %v1514 = vunpack.c.h.b16 %v1466
      %v1515 = vunpack.c.l.b16 %v1467
      %v1516 = vunpack.c.h.b16 %v1467
      %v1517 = vunpack.c.l.b16 %v1468
      %v1518 = vunpack.c.h.b16 %v1468
      %v1519 = vpack.c.b16 %v1489, %v1487
      %v1520 = vpack.c.b16 %v1490, %v1488
      %v1521 = vpack.c.b16 %v1493, %v1491
      %v1522 = vpack.c.b16 %v1494, %v1492
      %v1523 = vpack.c.b16 %v1497, %v1495
      %v1524 = vpack.c.b16 %v1498, %v1496
      %v1525 = vpack.c.b16 %v1501, %v1499
      %v1526 = vpack.c.b16 %v1502, %v1500
      %v1527 = vpack.c.b16 %v1505, %v1503
      %v1528 = vpack.c.b16 %v1506, %v1504
      %v1529 = vpack.c.b16 %v1509, %v1507
      %v1530 = vpack.c.b16 %v1510, %v1508
      %v1531 = vpack.c.b16 %v1513, %v1511
      %v1532 = vpack.c.b16 %v1514, %v1512
      %v1533 = vpack.c.b16 %v1517, %v1515
      %v1534 = vpack.c.b16 %v1518, %v1516
      %1551 = vmatpush.bf16.msra.mxu0 %v1533
      %1552 = vmatpush.bf16.msra.mxu0 %v1531
      %1553 = vmatpush.bf16.msra.mxu0 %v1529
      %1554 = vmatpush.bf16.msra.mxu0 %v1527
      %1555 = vmatpush.bf16.msra.mxu0 %v1525
      %1556 = vmatpush.bf16.msra.mxu0 %v1523
      %1557 = vmatpush.bf16.msra.mxu0 %v1521
      %1558 = vmatpush.bf16.msra.mxu0 %v1519
      %1559 = vmatmul.bf16.gmra.mxu0 %v1451
      %v1560 = vpop.f32.mrf.mxu0
      %v1561 = vadd.f32 %v1469, %v1560
      %v1562 = vpop.f32.mrf.mxu0
      %v1563 = vadd.f32 %v1469, %v1562
      %1564 = vmatmul.bf16.gmra.mxu0 %v1452
      %v1565 = vpop.f32.mrf.mxu0
      %v1566 = vadd.f32 %v1469, %v1565
      %v1567 = vpop.f32.mrf.mxu0
      %v1568 = vadd.f32 %v1469, %v1567
      %1569 = vdwg.mxu0
      %1570 = vmatpush.bf16.msra.mxu0 %v1534
      %1571 = vmatpush.bf16.msra.mxu0 %v1532
      %1572 = vmatpush.bf16.msra.mxu0 %v1530
      %1573 = vmatpush.bf16.msra.mxu0 %v1528
      %1574 = vmatpush.bf16.msra.mxu0 %v1526
      %1575 = vmatpush.bf16.msra.mxu0 %v1524
      %1576 = vmatpush.bf16.msra.mxu0 %v1522
      %1577 = vmatpush.bf16.msra.mxu0 %v1520
      %1578 = vmatmul.bf16.gmra.mxu0 %v1451
      %v1579 = vpop.f32.mrf.mxu0
      %v1580 = vadd.f32 %v1470, %v1579
      %v1581 = vpop.f32.mrf.mxu0
      %v1582 = vadd.f32 %v1470, %v1581
      %1583 = vmatmul.bf16.gmra.mxu0 %v1452
      %v1584 = vpop.f32.mrf.mxu0
      %v1585 = vadd.f32 %v1470, %v1584
      %v1586 = vpop.f32.mrf.mxu0
      %v1587 = vadd.f32 %v1470, %v1586
      %1588 = vdwg.mxu0
      %v1589 = vmul.f32 %v1561, 0.5
      %v1590 = vmul.f32 %v1580, 0.5
      %v1591 = vmul.f32 %v1563, 0.5
      %v1592 = vmul.f32 %v1582, 0.5
      %v1593 = vmul.f32 %v1566, 0.5
      %v1594 = vmul.f32 %v1585, 0.5
      %v1595 = vmul.f32 %v1568, 0.5
      %v1596 = vmul.f32 %v1587, 0.5
      %v1597 = vmul.f32 %v1561, 0.70710677
      %v1598 = vmul.f32 %v1580, 0.70710677
      %v1599 = vmul.f32 %v1563, 0.70710677
      %v1600 = vmul.f32 %v1582, 0.70710677
      %v1601 = vmul.f32 %v1566, 0.70710677
      %v1602 = vmul.f32 %v1585, 0.70710677
      %v1603 = vmul.f32 %v1568, 0.70710677
      %v1604 = vmul.f32 %v1587, 0.70710677
      %v1605 = vmul.f32 %v1597, %v1597
      %v1606 = vmin.f32 16.0, %v1605
      %v1607 = vmul.f32 %v1606, 2.1237322e-06
      %v1608 = vadd.f32 %v1607, 0.00028619796
      %v1609 = vmul.f32 %v1606, %v1608
      %v1610 = vadd.f32 %v1609, 0.0036580483
      %v1611 = vmul.f32 %v1606, %v1610
      %v1612 = vadd.f32 %v1611, 0.05243302
      %v1613 = vmul.f32 %v1606, %v1612
      %v1614 = vadd.f32 %v1613, 0.18741608
      %v1615 = vmul.f32 %v1606, %v1614
      %v1616 = vadd.f32 %v1615, 1.1283791
      %v1617 = vmul.f32 %v1597, %v1616
      %v1618 = vmul.f32 %v1606, 3.8918573e-05
      %v1619 = vadd.f32 %v1618, 0.001143296
      %v1620 = vmul.f32 %v1606, %v1619
      %v1621 = vadd.f32 %v1620, 0.014752088
      %v1622 = vmul.f32 %v1606, %v1621
      %v1623 = vadd.f32 %v1622, 0.112945676
      %v1624 = vmul.f32 %v1606, %v1623
      %v1625 = vadd.f32 %v1624, 0.4994258
      %v1626 = vmul.f32 %v1606, %v1625
      %v1627 = vadd.f32 %v1626, 1.0
      %v1628 = vrcp.pop %v1627
      %v1629 = vmul.f32 %v1627, %v1628
      %v1630 = vsub.f32 1.0, %v1629
      %v1631 = vmul.f32 %v1628, %v1630
      %v1632 = vadd.f32 %v1628, %v1631
      %vm1633 = vweird.f32 %v1627
      %vm1634 = vweird.f32 %v1628
      %vm1635 = vmor %vm1633, %vm1634
      %v1636 = vsel %vm1635, %v1628, %v1632
      %v1637 = vand.u32 2147483647, %v1627
      %vm1638 = vcmp.eq.f32.partialorder %v1637, 8.507059e+37
      %v1639 = vand.u32 %v1627, 2147483648
      %v1640 = vor.u32 1.1754944e-38, %v1639
      %v1641 = vsel %vm1638, %v1640, %v1636
      %v1642 = vmul.f32 %v1617, %v1641
      %v1643 = vmin.f32 %v1642, 1.0
      %v1644 = vmax.f32 %v1643, -1.0
      %v1645 = vmul.f32 %v1598, %v1598
      %v1646 = vmin.f32 16.0, %v1645
      %v1647 = vmul.f32 %v1646, 2.1237322e-06
      %v1648 = vadd.f32 %v1647, 0.00028619796
      %v1649 = vmul.f32 %v1646, %v1648
      %v1650 = vadd.f32 %v1649, 0.0036580483
      %v1651 = vmul.f32 %v1646, %v1650
      %v1652 = vadd.f32 %v1651, 0.05243302
      %v1653 = vmul.f32 %v1646, %v1652
      %v1654 = vadd.f32 %v1653, 0.18741608
      %v1655 = vmul.f32 %v1646, %v1654
      %v1656 = vadd.f32 %v1655, 1.1283791
      %v1657 = vmul.f32 %v1598, %v1656
      %v1658 = vmul.f32 %v1646, 3.8918573e-05
      %v1659 = vadd.f32 %v1658, 0.001143296
      %v1660 = vmul.f32 %v1646, %v1659
      %v1661 = vadd.f32 %v1660, 0.014752088
      %v1662 = vmul.f32 %v1646, %v1661
      %v1663 = vadd.f32 %v1662, 0.112945676
      %v1664 = vmul.f32 %v1646, %v1663
      %v1665 = vadd.f32 %v1664, 0.4994258
      %v1666 = vmul.f32 %v1646, %v1665
      %v1667 = vadd.f32 %v1666, 1.0
      %v1668 = vrcp.pop %v1667
      %v1669 = vmul.f32 %v1667, %v1668
      %v1670 = vsub.f32 1.0, %v1669
      %v1671 = vmul.f32 %v1668, %v1670
      %v1672 = vadd.f32 %v1668, %v1671
      %vm1673 = vweird.f32 %v1667
      %vm1674 = vweird.f32 %v1668
      %vm1675 = vmor %vm1673, %vm1674
      %v1676 = vsel %vm1675, %v1668, %v1672
      %v1677 = vand.u32 2147483647, %v1667
      %vm1678 = vcmp.eq.f32.partialorder %v1677, 8.507059e+37
      %v1679 = vand.u32 %v1667, 2147483648
      %v1680 = vor.u32 1.1754944e-38, %v1679
      %v1681 = vsel %vm1678, %v1680, %v1676
      %v1682 = vmul.f32 %v1657, %v1681
      %v1683 = vmin.f32 %v1682, 1.0
      %v1684 = vmax.f32 %v1683, -1.0
      %v1685 = vmul.f32 %v1599, %v1599
      %v1686 = vmin.f32 16.0, %v1685
      %v1687 = vmul.f32 %v1686, 2.1237322e-06
      %v1688 = vadd.f32 %v1687, 0.00028619796
      %v1689 = vmul.f32 %v1686, %v1688
      %v1690 = vadd.f32 %v1689, 0.0036580483
      %v1691 = vmul.f32 %v1686, %v1690
      %v1692 = vadd.f32 %v1691, 0.05243302
      %v1693 = vmul.f32 %v1686, %v1692
      %v1694 = vadd.f32 %v1693, 0.18741608
      %v1695 = vmul.f32 %v1686, %v1694
      %v1696 = vadd.f32 %v1695, 1.1283791
      %v1697 = vmul.f32 %v1599, %v1696
      %v1698 = vmul.f32 %v1686, 3.8918573e-05
      %v1699 = vadd.f32 %v1698, 0.001143296
      %v1700 = vmul.f32 %v1686, %v1699
      %v1701 = vadd.f32 %v1700, 0.014752088
      %v1702 = vmul.f32 %v1686, %v1701
      %v1703 = vadd.f32 %v1702, 0.112945676
      %v1704 = vmul.f32 %v1686, %v1703
      %v1705 = vadd.f32 %v1704, 0.4994258
      %v1706 = vmul.f32 %v1686, %v1705
      %v1707 = vadd.f32 %v1706, 1.0
      %v1708 = vrcp.pop %v1707
      %v1709 = vmul.f32 %v1707, %v1708
      %v1710 = vsub.f32 1.0, %v1709
      %v1711 = vmul.f32 %v1708, %v1710
      %v1712 = vadd.f32 %v1708, %v1711
      %vm1713 = vweird.f32 %v1707
      %vm1714 = vweird.f32 %v1708
      %vm1715 = vmor %vm1713, %vm1714
      %v1716 = vsel %vm1715, %v1708, %v1712
      %v1717 = vand.u32 2147483647, %v1707
      %vm1718 = vcmp.eq.f32.partialorder %v1717, 8.507059e+37
      %v1719 = vand.u32 %v1707, 2147483648
      %v1720 = vor.u32 1.1754944e-38, %v1719
      %v1721 = vsel %vm1718, %v1720, %v1716
      %v1722 = vmul.f32 %v1697, %v1721
      %v1723 = vmin.f32 %v1722, 1.0
      %v1724 = vmax.f32 %v1723, -1.0
      %v1725 = vmul.f32 %v1600, %v1600
      %v1726 = vmin.f32 16.0, %v1725
      %v1727 = vmul.f32 %v1726, 2.1237322e-06
      %v1728 = vadd.f32 %v1727, 0.00028619796
      %v1729 = vmul.f32 %v1726, %v1728
      %v1730 = vadd.f32 %v1729, 0.0036580483
      %v1731 = vmul.f32 %v1726, %v1730
      %v1732 = vadd.f32 %v1731, 0.05243302
      %v1733 = vmul.f32 %v1726, %v1732
      %v1734 = vadd.f32 %v1733, 0.18741608
      %v1735 = vmul.f32 %v1726, %v1734
      %v1736 = vadd.f32 %v1735, 1.1283791
      %v1737 = vmul.f32 %v1600, %v1736
      %v1738 = vmul.f32 %v1726, 3.8918573e-05
      %v1739 = vadd.f32 %v1738, 0.001143296
      %v1740 = vmul.f32 %v1726, %v1739
      %v1741 = vadd.f32 %v1740, 0.014752088
      %v1742 = vmul.f32 %v1726, %v1741
      %v1743 = vadd.f32 %v1742, 0.112945676
      %v1744 = vmul.f32 %v1726, %v1743
      %v1745 = vadd.f32 %v1744, 0.4994258
      %v1746 = vmul.f32 %v1726, %v1745
      %v1747 = vadd.f32 %v1746, 1.0
      %v1748 = vrcp.pop %v1747
      %v1749 = vmul.f32 %v1747, %v1748
      %v1750 = vsub.f32 1.0, %v1749
      %v1751 = vmul.f32 %v1748, %v1750
      %v1752 = vadd.f32 %v1748, %v1751
      %vm1753 = vweird.f32 %v1747
      %vm1754 = vweird.f32 %v1748
      %vm1755 = vmor %vm1753, %vm1754
      %v1756 = vsel %vm1755, %v1748, %v1752
      %v1757 = vand.u32 2147483647, %v1747
      %vm1758 = vcmp.eq.f32.partialorder %v1757, 8.507059e+37
      %v1759 = vand.u32 %v1747, 2147483648
      %v1760 = vor.u32 1.1754944e-38, %v1759
      %v1761 = vsel %vm1758, %v1760, %v1756
      %v1762 = vmul.f32 %v1737, %v1761
      %v1763 = vmin.f32 %v1762, 1.0
      %v1764 = vmax.f32 %v1763, -1.0
      %v1765 = vmul.f32 %v1601, %v1601
      %v1766 = vmin.f32 16.0, %v1765
      %v1767 = vmul.f32 %v1766, 2.1237322e-06
      %v1768 = vadd.f32 %v1767, 0.00028619796
      %v1769 = vmul.f32 %v1766, %v1768
      %v1770 = vadd.f32 %v1769, 0.0036580483
      %v1771 = vmul.f32 %v1766, %v1770
      %v1772 = vadd.f32 %v1771, 0.05243302
      %v1773 = vmul.f32 %v1766, %v1772
      %v1774 = vadd.f32 %v1773, 0.18741608
      %v1775 = vmul.f32 %v1766, %v1774
      %v1776 = vadd.f32 %v1775, 1.1283791
      %v1777 = vmul.f32 %v1601, %v1776
      %v1778 = vmul.f32 %v1766, 3.8918573e-05
      %v1779 = vadd.f32 %v1778, 0.001143296
      %v1780 = vmul.f32 %v1766, %v1779
      %v1781 = vadd.f32 %v1780, 0.014752088
      %v1782 = vmul.f32 %v1766, %v1781
      %v1783 = vadd.f32 %v1782, 0.112945676
      %v1784 = vmul.f32 %v1766, %v1783
      %v1785 = vadd.f32 %v1784, 0.4994258
      %v1786 = vmul.f32 %v1766, %v1785
      %v1787 = vadd.f32 %v1786, 1.0
      %v1788 = vrcp.pop %v1787
      %v1789 = vmul.f32 %v1787, %v1788
      %v1790 = vsub.f32 1.0, %v1789
      %v1791 = vmul.f32 %v1788, %v1790
      %v1792 = vadd.f32 %v1788, %v1791
      %vm1793 = vweird.f32 %v1787
      %vm1794 = vweird.f32 %v1788
      %vm1795 = vmor %vm1793, %vm1794
      %v1796 = vsel %vm1795, %v1788, %v1792
      %v1797 = vand.u32 2147483647, %v1787
      %vm1798 = vcmp.eq.f32.partialorder %v1797, 8.507059e+37
      %v1799 = vand.u32 %v1787, 2147483648
      %v1800 = vor.u32 1.1754944e-38, %v1799
      %v1801 = vsel %vm1798, %v1800, %v1796
      %v1802 = vmul.f32 %v1777, %v1801
      %v1803 = vmin.f32 %v1802, 1.0
      %v1804 = vmax.f32 %v1803, -1.0
      %v1805 = vmul.f32 %v1602, %v1602
      %v1806 = vmin.f32 16.0, %v1805
      %v1807 = vmul.f32 %v1806, 2.1237322e-06
      %v1808 = vadd.f32 %v1807, 0.00028619796
      %v1809 = vmul.f32 %v1806, %v1808
      %v1810 = vadd.f32 %v1809, 0.0036580483
      %v1811 = vmul.f32 %v1806, %v1810
      %v1812 = vadd.f32 %v1811, 0.05243302
      %v1813 = vmul.f32 %v1806, %v1812
      %v1814 = vadd.f32 %v1813, 0.18741608
      %v1815 = vmul.f32 %v1806, %v1814
      %v1816 = vadd.f32 %v1815, 1.1283791
      %v1817 = vmul.f32 %v1602, %v1816
      %v1818 = vmul.f32 %v1806, 3.8918573e-05
      %v1819 = vadd.f32 %v1818, 0.001143296
      %v1820 = vmul.f32 %v1806, %v1819
      %v1821 = vadd.f32 %v1820, 0.014752088
      %v1822 = vmul.f32 %v1806, %v1821
      %v1823 = vadd.f32 %v1822, 0.112945676
      %v1824 = vmul.f32 %v1806, %v1823
      %v1825 = vadd.f32 %v1824, 0.4994258
      %v1826 = vmul.f32 %v1806, %v1825
      %v1827 = vadd.f32 %v1826, 1.0
      %v1828 = vrcp.pop %v1827
      %v1829 = vmul.f32 %v1827, %v1828
      %v1830 = vsub.f32 1.0, %v1829
      %v1831 = vmul.f32 %v1828, %v1830
      %v1832 = vadd.f32 %v1828, %v1831
      %vm1833 = vweird.f32 %v1827
      %vm1834 = vweird.f32 %v1828
      %vm1835 = vmor %vm1833, %vm1834
      %v1836 = vsel %vm1835, %v1828, %v1832
      %v1837 = vand.u32 2147483647, %v1827
      %vm1838 = vcmp.eq.f32.partialorder %v1837, 8.507059e+37
      %v1839 = vand.u32 %v1827, 2147483648
      %v1840 = vor.u32 1.1754944e-38, %v1839
      %v1841 = vsel %vm1838, %v1840, %v1836
      %v1842 = vmul.f32 %v1817, %v1841
      %v1843 = vmin.f32 %v1842, 1.0
      %v1844 = vmax.f32 %v1843, -1.0
      %v1845 = vmul.f32 %v1603, %v1603
      %v1846 = vmin.f32 16.0, %v1845
      %v1847 = vmul.f32 %v1846, 2.1237322e-06
      %v1848 = vadd.f32 %v1847, 0.00028619796
      %v1849 = vmul.f32 %v1846, %v1848
      %v1850 = vadd.f32 %v1849, 0.0036580483
      %v1851 = vmul.f32 %v1846, %v1850
      %v1852 = vadd.f32 %v1851, 0.05243302
      %v1853 = vmul.f32 %v1846, %v1852
      %v1854 = vadd.f32 %v1853, 0.18741608
      %v1855 = vmul.f32 %v1846, %v1854
      %v1856 = vadd.f32 %v1855, 1.1283791
      %v1857 = vmul.f32 %v1603, %v1856
      %v1858 = vmul.f32 %v1846, 3.8918573e-05
      %v1859 = vadd.f32 %v1858, 0.001143296
      %v1860 = vmul.f32 %v1846, %v1859
      %v1861 = vadd.f32 %v1860, 0.014752088
      %v1862 = vmul.f32 %v1846, %v1861
      %v1863 = vadd.f32 %v1862, 0.112945676
      %v1864 = vmul.f32 %v1846, %v1863
      %v1865 = vadd.f32 %v1864, 0.4994258
      %v1866 = vmul.f32 %v1846, %v1865
      %v1867 = vadd.f32 %v1866, 1.0
      %v1868 = vrcp.pop %v1867
      %v1869 = vmul.f32 %v1867, %v1868
      %v1870 = vsub.f32 1.0, %v1869
      %v1871 = vmul.f32 %v1868, %v1870
      %v1872 = vadd.f32 %v1868, %v1871
      %vm1873 = vweird.f32 %v1867
      %vm1874 = vweird.f32 %v1868
      %vm1875 = vmor %vm1873, %vm1874
      %v1876 = vsel %vm1875, %v1868, %v1872
      %v1877 = vand.u32 2147483647, %v1867
      %vm1878 = vcmp.eq.f32.partialorder %v1877, 8.507059e+37
      %v1879 = vand.u32 %v1867, 2147483648
      %v1880 = vor.u32 1.1754944e-38, %v1879
      %v1881 = vsel %vm1878, %v1880, %v1876
      %v1882 = vmul.f32 %v1857, %v1881
      %v1883 = vmin.f32 %v1882, 1.0
      %v1884 = vmax.f32 %v1883, -1.0
      %v1885 = vmul.f32 %v1604, %v1604
      %v1886 = vmin.f32 16.0, %v1885
      %v1887 = vmul.f32 %v1886, 2.1237322e-06
      %v1888 = vadd.f32 %v1887, 0.00028619796
      %v1889 = vmul.f32 %v1886, %v1888
      %v1890 = vadd.f32 %v1889, 0.0036580483
      %v1891 = vmul.f32 %v1886, %v1890
      %v1892 = vadd.f32 %v1891, 0.05243302
      %v1893 = vmul.f32 %v1886, %v1892
      %v1894 = vadd.f32 %v1893, 0.18741608
      %v1895 = vmul.f32 %v1886, %v1894
      %v1896 = vadd.f32 %v1895, 1.1283791
      %v1897 = vmul.f32 %v1604, %v1896
      %v1898 = vmul.f32 %v1886, 3.8918573e-05
      %v1899 = vadd.f32 %v1898, 0.001143296
      %v1900 = vmul.f32 %v1886, %v1899
      %v1901 = vadd.f32 %v1900, 0.014752088
      %v1902 = vmul.f32 %v1886, %v1901
      %v1903 = vadd.f32 %v1902, 0.112945676
      %v1904 = vmul.f32 %v1886, %v1903
      %v1905 = vadd.f32 %v1904, 0.4994258
      %v1906 = vmul.f32 %v1886, %v1905
      %v1907 = vadd.f32 %v1906, 1.0
      %v1908 = vrcp.pop %v1907
      %v1909 = vmul.f32 %v1907, %v1908
      %v1910 = vsub.f32 1.0, %v1909
      %v1911 = vmul.f32 %v1908, %v1910
      %v1912 = vadd.f32 %v1908, %v1911
      %vm1913 = vweird.f32 %v1907
      %vm1914 = vweird.f32 %v1908
      %vm1915 = vmor %vm1913, %vm1914
      %v1916 = vsel %vm1915, %v1908, %v1912
      %v1917 = vand.u32 2147483647, %v1907
      %vm1918 = vcmp.eq.f32.partialorder %v1917, 8.507059e+37
      %v1919 = vand.u32 %v1907, 2147483648
      %v1920 = vor.u32 1.1754944e-38, %v1919
      %v1921 = vsel %vm1918, %v1920, %v1916
      %v1922 = vmul.f32 %v1897, %v1921
      %v1923 = vmin.f32 %v1922, 1.0
      %v1924 = vmax.f32 %v1923, -1.0
      %v1925 = vadd.f32 %v1644, 1.0
      %v1926 = vadd.f32 %v1684, 1.0
      %v1927 = vadd.f32 %v1724, 1.0
      %v1928 = vadd.f32 %v1764, 1.0
      %v1929 = vadd.f32 %v1804, 1.0
      %v1930 = vadd.f32 %v1844, 1.0
      %v1931 = vadd.f32 %v1884, 1.0
      %v1932 = vadd.f32 %v1924, 1.0
      %v1933 = vmul.f32 %v1589, %v1925
      %v1934 = vmul.f32 %v1590, %v1926
      %v1935 = vmul.f32 %v1591, %v1927
      %v1936 = vmul.f32 %v1592, %v1928
      %v1937 = vmul.f32 %v1593, %v1929
      %v1938 = vmul.f32 %v1594, %v1930
      %v1939 = vmul.f32 %v1595, %v1931
      %v1940 = vmul.f32 %v1596, %v1932
      %v1941 = vpack.c.bf16 %v1935, %v1933
      %v1942 = vpack.c.bf16 %v1936, %v1934
      %v1943 = vpack.c.bf16 %v1939, %v1937
      %v1944 = vpack.c.bf16 %v1940, %v1938
      %v1945 = vld [vmem:[%s365] sm:$0xf]
      %v1946 = vld [vmem:[%s365 + $0x4] sm:$0xf]
      %v1947 = vld [vmem:[%s365 + $0x8] sm:$0xf]
      %v1948 = vld [vmem:[%s365 + $0xc] sm:$0xf]
      %v1949 = vld [vmem:[%s365 + $0x10] sm:$0xf]
      %v1950 = vld [vmem:[%s365 + $0x14] sm:$0xf]
      %v1951 = vld [vmem:[%s365 + $0x18] sm:$0xf]
      %v1952 = vld [vmem:[%s365 + $0x1c] sm:$0xf]
      %v1953 = vld [vmem:[%s365 + $0x20] sm:$0xf]
      %v1954 = vld [vmem:[%s365 + $0x24] sm:$0xf]
      %v1955 = vld [vmem:[%s365 + $0x28] sm:$0xf]
      %v1956 = vld [vmem:[%s365 + $0x2c] sm:$0xf]
      %v1957 = vld [vmem:[%s365 + $0x30] sm:$0xf]
      %v1958 = vld [vmem:[%s365 + $0x34] sm:$0xf]
      %v1959 = vld [vmem:[%s365 + $0x38] sm:$0xf]
      %v1960 = vld [vmem:[%s365 + $0x3c] sm:$0xf]
      %v1961 = vld [vmem:[%s365 + $0x40] sm:$0xf]
      %v1962 = vld [vmem:[%s365 + $0x44] sm:$0xf]
      %v1963 = vld [vmem:[%s365 + $0x48] sm:$0xf]
      %v1964 = vld [vmem:[%s365 + $0x4c] sm:$0xf]
      %v1965 = vld [vmem:[%s365 + $0x50] sm:$0xf]
      %v1966 = vld [vmem:[%s365 + $0x54] sm:$0xf]
      %v1967 = vld [vmem:[%s365 + $0x58] sm:$0xf]
      %v1968 = vld [vmem:[%s365 + $0x5c] sm:$0xf]
      %v1969 = vld [vmem:[%s365 + $0x60] sm:$0xf]
      %v1970 = vld [vmem:[%s365 + $0x64] sm:$0xf]
      %v1971 = vld [vmem:[%s365 + $0x68] sm:$0xf]
      %v1972 = vld [vmem:[%s365 + $0x6c] sm:$0xf]
      %v1973 = vld [vmem:[%s365 + $0x70] sm:$0xf]
      %v1974 = vld [vmem:[%s365 + $0x74] sm:$0xf]
      %v1975 = vld [vmem:[%s365 + $0x78] sm:$0xf]
      %v1976 = vld [vmem:[%s365 + $0x7c] sm:$0xf]
      %v1977 = vperm.slane %v486, 5
      %v2010 = vunpack.c.l.b16 %v1945
      %v2011 = vunpack.c.l.b16 %v1946
      %v2012 = vunpack.c.l.b16 %v1947
      %v2013 = vunpack.c.l.b16 %v1948
      %v2014 = vunpack.c.l.b16 %v1949
      %v2015 = vunpack.c.l.b16 %v1950
      %v2016 = vunpack.c.l.b16 %v1951
      %v2017 = vunpack.c.l.b16 %v1952
      %v2018 = vunpack.c.l.b16 %v1953
      %v2019 = vunpack.c.l.b16 %v1954
      %v2020 = vunpack.c.l.b16 %v1955
      %v2021 = vunpack.c.l.b16 %v1956
      %v2022 = vunpack.c.l.b16 %v1957
      %v2023 = vunpack.c.l.b16 %v1958
      %v2024 = vunpack.c.l.b16 %v1959
      %v2025 = vunpack.c.l.b16 %v1960
      %v2026 = vunpack.c.l.b16 %v1961
      %v2027 = vunpack.c.l.b16 %v1962
      %v2028 = vunpack.c.l.b16 %v1963
      %v2029 = vunpack.c.l.b16 %v1964
      %v2030 = vunpack.c.l.b16 %v1965
      %v2031 = vunpack.c.l.b16 %v1966
      %v2032 = vunpack.c.l.b16 %v1967
      %v2033 = vunpack.c.l.b16 %v1968
      %v2034 = vunpack.c.l.b16 %v1969
      %v2035 = vunpack.c.l.b16 %v1970
      %v2036 = vunpack.c.l.b16 %v1971
      %v2037 = vunpack.c.l.b16 %v1972
      %v2038 = vunpack.c.l.b16 %v1973
      %v2039 = vunpack.c.l.b16 %v1974
      %v2040 = vunpack.c.l.b16 %v1975
      %v2041 = vunpack.c.l.b16 %v1976
      %v2042 = vpack.c.b16 %v2011, %v2010
      %v2043 = vpack.c.b16 %v2013, %v2012
      %v2044 = vpack.c.b16 %v2015, %v2014
      %v2045 = vpack.c.b16 %v2017, %v2016
      %v2046 = vpack.c.b16 %v2019, %v2018
      %v2047 = vpack.c.b16 %v2021, %v2020
      %v2048 = vpack.c.b16 %v2023, %v2022
      %v2049 = vpack.c.b16 %v2025, %v2024
      %v2050 = vpack.c.b16 %v2027, %v2026
      %v2051 = vpack.c.b16 %v2029, %v2028
      %v2052 = vpack.c.b16 %v2031, %v2030
      %v2053 = vpack.c.b16 %v2033, %v2032
      %v2054 = vpack.c.b16 %v2035, %v2034
      %v2055 = vpack.c.b16 %v2037, %v2036
      %v2056 = vpack.c.b16 %v2039, %v2038
      %v2057 = vpack.c.b16 %v2041, %v2040
      %2074 = vmatpush.bf16.msra.mxu0 %v2049
      %2075 = vmatpush.bf16.msra.mxu0 %v2048
      %2076 = vmatpush.bf16.msra.mxu0 %v2047
      %2077 = vmatpush.bf16.msra.mxu0 %v2046
      %2078 = vmatpush.bf16.msra.mxu0 %v2045
      %2079 = vmatpush.bf16.msra.mxu0 %v2044
      %2080 = vmatpush.bf16.msra.mxu0 %v2043
      %2081 = vmatpush.bf16.msra.mxu0 %v2042
      %2082 = vmatmul.bf16.gmra.mxu0 %v1941
      %v2083 = vpop.f32.mrf.mxu0
      %v2084 = vadd.f32 %v1977, %v2083
      %v2085 = vpop.f32.mrf.mxu0
      %v2086 = vadd.f32 %v1977, %v2085
      %2087 = vmatmul.bf16.gmra.mxu0 %v1943
      %v2088 = vpop.f32.mrf.mxu0
      %v2089 = vadd.f32 %v1977, %v2088
      %v2090 = vpop.f32.mrf.mxu0
      %v2091 = vadd.f32 %v1977, %v2090
      %2092 = vdwg.mxu0
      %2093 = vmatpush.bf16.msra.mxu0 %v2057
      %2094 = vmatpush.bf16.msra.mxu0 %v2056
      %2095 = vmatpush.bf16.msra.mxu0 %v2055
      %2096 = vmatpush.bf16.msra.mxu0 %v2054
      %2097 = vmatpush.bf16.msra.mxu0 %v2053
      %2098 = vmatpush.bf16.msra.mxu0 %v2052
      %2099 = vmatpush.bf16.msra.mxu0 %v2051
      %2100 = vmatpush.bf16.msra.mxu0 %v2050
      %2101 = vmatmul.bf16.gmra.mxu0 %v1942
      %v2102 = vpop.f32.mrf.mxu0
      %v2103 = vadd.f32 %v2084, %v2102
      %v2104 = vpop.f32.mrf.mxu0
      %v2105 = vadd.f32 %v2086, %v2104
      %2106 = vmatmul.bf16.gmra.mxu0 %v1944
      %v2107 = vpop.f32.mrf.mxu0
      %v2108 = vadd.f32 %v2089, %v2107
      %v2109 = vpop.f32.mrf.mxu0
      %v2110 = vadd.f32 %v2091, %v2109
      %2111 = vdwg.mxu0
      %v2112 = vadd.f32 %v2103, %v1447
      %v2113 = vadd.f32 %v2105, %v1448
      %v2114 = vadd.f32 %v2108, %v1449
      %v2115 = vadd.f32 %v2110, %v1450
      %2116 = vadd.xlane.f32.xlu0 %v2112
      %v2117 = vpop.xlane.xlu0 %2116
      %2118 = vadd.xlane.f32.xlu0 %v2113
      %v2119 = vpop.xlane.xlu0 %2118
      %2120 = vadd.xlane.f32.xlu0 %v2114
      %v2121 = vpop.xlane.xlu0 %2120
      %2122 = vadd.xlane.f32.xlu0 %v2115
      %v2123 = vpop.xlane.xlu0 %2122
      %v2124 = vmul.f32 %v2117, %v1368
      %v2125 = vmul.f32 %v2119, %v1368
      %v2126 = vmul.f32 %v2121, %v1368
      %v2127 = vmul.f32 %v2123, %v1368
      %v2128 = vsub.f32 %v2112, %v2124
      %v2129 = vsub.f32 %v2113, %v2125
      %v2130 = vsub.f32 %v2114, %v2126
      %v2131 = vsub.f32 %v2115, %v2127
      %v2132 = vmul.f32 %v2128, %v2128
      %v2133 = vmul.f32 %v2129, %v2129
      %v2134 = vmul.f32 %v2130, %v2130
      %v2135 = vmul.f32 %v2131, %v2131
      %2136 = vadd.xlane.f32.xlu0 %v2132
      %v2137 = vpop.xlane.xlu0 %2136
      %2138 = vadd.xlane.f32.xlu0 %v2133
      %v2139 = vpop.xlane.xlu0 %2138
      %2140 = vadd.xlane.f32.xlu0 %v2134
      %v2141 = vpop.xlane.xlu0 %2140
      %2142 = vadd.xlane.f32.xlu0 %v2135
      %v2143 = vpop.xlane.xlu0 %2142
      %v2144 = vmul.f32 %v2137, %v1368
      %v2145 = vmul.f32 %v2139, %v1368
      %v2146 = vmul.f32 %v2141, %v1368
      %v2147 = vmul.f32 %v2143, %v1368
      %v2148 = vadd.f32 %v2144, 1e-12
      %v2149 = vadd.f32 %v2145, 1e-12
      %v2150 = vadd.f32 %v2146, 1e-12
      %v2151 = vadd.f32 %v2147, 1e-12
      %v2152 = vrsqrt.pop %v2148
      %v2153 = vmul.f32 %v2152, %v2148
      %v2154 = vmul.f32 %v2153, %v2152
      %v2155 = vmul.f32 0.5, %v2154
      %v2156 = vsub.f32 1.5, %v2155
      %v2157 = vmul.f32 %v2152, %v2156
      %vm2158 = vweird.f32 %v2148
      %vm2159 = vweird.f32 %v2152
      %vm2160 = vmor %vm2158, %vm2159
      %v2161 = vsel %vm2160, %v2152, %v2157
      %v2162 = vrsqrt.pop %v2149
      %v2163 = vmul.f32 %v2162, %v2149
      %v2164 = vmul.f32 %v2163, %v2162
      %v2165 = vmul.f32 0.5, %v2164
      %v2166 = vsub.f32 1.5, %v2165
      %v2167 = vmul.f32 %v2162, %v2166
      %vm2168 = vweird.f32 %v2149
      %vm2169 = vweird.f32 %v2162
      %vm2170 = vmor %vm2168, %vm2169
      %v2171 = vsel %vm2170, %v2162, %v2167
      %v2172 = vrsqrt.pop %v2150
      %v2173 = vmul.f32 %v2172, %v2150
      %v2174 = vmul.f32 %v2173, %v2172
      %v2175 = vmul.f32 0.5, %v2174
      %v2176 = vsub.f32 1.5, %v2175
      %v2177 = vmul.f32 %v2172, %v2176
      %vm2178 = vweird.f32 %v2150
      %vm2179 = vweird.f32 %v2172
      %vm2180 = vmor %vm2178, %vm2179
      %v2181 = vsel %vm2180, %v2172, %v2177
      %v2182 = vrsqrt.pop %v2151
      %v2183 = vmul.f32 %v2182, %v2151
      %v2184 = vmul.f32 %v2183, %v2182
      %v2185 = vmul.f32 0.5, %v2184
      %v2186 = vsub.f32 1.5, %v2185
      %v2187 = vmul.f32 %v2182, %v2186
      %vm2188 = vweird.f32 %v2151
      %vm2189 = vweird.f32 %v2182
      %vm2190 = vmor %vm2188, %vm2189
      %v2191 = vsel %vm2190, %v2182, %v2187
      %v2192 = vmul.f32 %v2128, %v2161
      %v2193 = vmul.f32 %v2129, %v2171
      %v2194 = vmul.f32 %v2130, %v2181
      %v2195 = vmul.f32 %v2131, %v2191
      %v2196 = vperm.slane %v486, 6
      %v2197 = vmul.f32 %v2192, %v2196
      %v2198 = vmul.f32 %v2193, %v2196
      %v2199 = vmul.f32 %v2194, %v2196
      %v2200 = vmul.f32 %v2195, %v2196
      %v2201 = vperm.slane %v486, 7
      %v2202 = vadd.f32 %v2197, %v2201
      %v2203 = vadd.f32 %v2198, %v2201
      %v2204 = vadd.f32 %v2199, %v2201
      %v2205 = vadd.f32 %v2200, %v2201
      %2206 = vst [vmem:[%s8] sm:$0xff] %v2202
      %2207 = vst [vmem:[%s8 + $0x8] sm:$0xff] %v2203
      %2208 = vst [vmem:[%s8 + $0x10] sm:$0xff] %v2204
      %2209 = vst [vmem:[%s8 + $0x18] sm:$0xff] %v2205
      // Predicated region
      $region57: #{bert_for_reranking_forward.1} parent=51 // pred_check
        %p2210 = pneg %p225
      $region58: #{bert_for_reranking_forward.1} parent=51 // pred_check_branch
        %2212 = sbr.rel (%p2210) target = $region60
      $region59: #{bert_for_reranking_forward.1} parent=51 // pred_region
        _
      $region60: #{bert_for_reranking_forward.1} parent=51 // pred_fallthru
        _
      // Predicated region
      $region61: #{bert_for_reranking_forward.1} parent=51 // pred_check
        %p2213 = pneg %p225
      $region62: #{bert_for_reranking_forward.1} parent=51 // pred_check_branch
        %2215 = sbr.rel (%p2213) target = $region64
      $region63: #{bert_for_reranking_forward.1} parent=51 // pred_region
        _
      $region64: #{bert_for_reranking_forward.1} parent=51 // pred_fallthru
        _
    $region52: #{bert_for_reranking_forward.1} parent=5 // pred_fallthru
      _
    %p2216 = scmp.le.s32.totalorder 2, %s14
    // Predicated region
    $region65: #{bert_for_reranking_forward.1} parent=5 // pred_check
      %p2217 = pneg %p2216
    $region66: #{bert_for_reranking_forward.1} parent=5 // pred_check_branch
      %2219 = sbr.rel (%p2217) target = $region68
    $region67: #{bert_for_reranking_forward.1} parent=5 // pred_region
      %s2220 = ssub.s32 %s14, 2
    $region68: #{bert_for_reranking_forward.1} parent=5 // pred_fallthru
      _
  $region6: #{bert_for_reranking_forward.1} parent=0 // loop_footer
    %s18 = sadd.s32 1, %s14
  $region7: #{bert_for_reranking_forward.1} parent=0 // loop_footer_branch
    %13 = sbr.rel target = $region3
  $region8: #{bert_for_reranking_forward.1} parent=0 // loop_exit
    _

</llo_original>
